<compile_context>
chip_gen: v7x
topology: tpu7x:2x2x1
jax: 0.10.0
libtpu: 0.0.40
codegen_flags: <defaults>
</compile_context>

<pallas_src>
import math

import jax
import jax.numpy as jnp
from jax import lax
from jax.experimental import pallas as pl
from jax.experimental.pallas import tpu as pltpu


# ----------------------------------------------------------------------------
# Host-side helper: (L, L) matrix A such that  mean = A @ x  reproduces the
# replicate-padded, stride-1 moving average of series_decomp / moving_avg.
# ----------------------------------------------------------------------------

def _make_decomp_matrix(L, kernel_size):
    pad = (kernel_size - 1) // 2
    inv_k = 1.0 / float(kernel_size)
    rows = []
    for i in range(L):
        row = [0.0] * L
        for j in range(i - pad, i - pad + kernel_size):
            jj = min(max(j, 0), L - 1)        # replicate padding -> clamp
            row[jj] += inv_k
        rows.append(row)
    return jnp.array(rows, dtype=jnp.float32)


# ----------------------------------------------------------------------------
# Fused decoder-layer kernel (one grid step == one batch element, squeezed).
# ----------------------------------------------------------------------------

def _decoder_layer_kernel(x_ref, cross_ref, avg_ref,
                          wq_s_ref, wk_s_ref, wv_s_ref, wo_s_ref,
                          wq_c_ref, wk_c_ref, wv_c_ref, wo_c_ref,
                          w1_ref, w2_ref, wproj_ref,
                          ox_ref, ot_ref):
    x = x_ref[...]                     # (L, D)
    cross = cross_ref[...]             # (S, D)
    avg = avg_ref[...]                 # (L, L) moving-average matrix

    def attention(q_in, kv, wq, wk, wv, wo):
        d = q_in.shape[-1]
        q = jnp.dot(q_in, wq, preferred_element_type=jnp.float32)
        k = jnp.dot(kv, wk, preferred_element_type=jnp.float32)
        v = jnp.dot(kv, wv, preferred_element_type=jnp.float32)
        # scores: contract last dims of q and k (no explicit k.T materialization)
        s = lax.dot_general(q, k, (((1,), (1,)), ((), ())),
                            preferred_element_type=jnp.float32)
        s = s * (1.0 / math.sqrt(float(d)))
        s = s - jnp.max(s, axis=-1, keepdims=True)
        p = jnp.exp(s)
        p = p * pl.reciprocal(jnp.sum(p, axis=-1, keepdims=True), approx=True)
        ctx = jnp.dot(p, v, preferred_element_type=jnp.float32)
        return jnp.dot(ctx, wo, preferred_element_type=jnp.float32)

    def decomp(z):
        mean = jnp.dot(avg, z, preferred_element_type=jnp.float32)   # MXU pass
        return z - mean, mean

    # x = x + self_attention(x, x, x)          (dropout == identity)
    x = x + attention(x, x,
                      wq_s_ref[...], wk_s_ref[...], wv_s_ref[...], wo_s_ref[...])
    x, trend1 = decomp(x)

    # x = x + cross_attention(x, cross, cross)
    x = x + attention(x, cross,
                      wq_c_ref[...], wk_c_ref[...], wv_c_ref[...], wo_c_ref[...])
    x, trend2 = decomp(x)

    # y = conv2(relu(conv1(x)))  (1x1 convs, no bias) ; x, trend3 = decomp3(x + y)
    h = jnp.maximum(jnp.dot(x, w1_ref[...], preferred_element_type=jnp.float32), 0.0)
    y = jnp.dot(h, w2_ref[...], preferred_element_type=jnp.float32)
    x, trend3 = decomp(x + y)

    ox_ref[...] = x

    # residual_trend = trend1 + trend2 + trend3
    # k=3 circular-padded Conv1d == one stacked (L, 3D) @ (3D, c_out) matmul.
    t = trend1 + trend2 + trend3                       # (L, D)
    L = t.shape[0]
    prev = pltpu.roll(t, 1, 0)                         # t[(i-1) mod L]
    nxt = pltpu.roll(t, L - 1, 0)                      # t[(i+1) mod L]
    stacked = jnp.concatenate([prev, t, nxt], axis=1)  # (L, 3D)
    ot_ref[...] = jnp.dot(stacked, wproj_ref[...],
                          preferred_element_type=jnp.float32)


# ----------------------------------------------------------------------------
# Wrapper: one pallas_call for the whole DecoderLayer.forward
# ----------------------------------------------------------------------------

def decoder_layer_forward(params, x, cross, moving_avg_k=25):
    B, L, D = x.shape
    S = cross.shape[1]
    F = params["w1"].shape[1]
    C = params["wproj"].shape[2]

    avg = _make_decomp_matrix(L, moving_avg_k)                       # (L, L)
    # projection Conv1d weight taps stacked along rows: [W_prev; W_center; W_next]
    wproj_stacked = jnp.concatenate(
        [params["wproj"][0], params["wproj"][1], params["wproj"][2]], axis=0)  # (3D, C)

    def seq_spec(n, d):
        return pl.BlockSpec((None, n, d), lambda b: (b, 0, 0))

    def mat_spec(r, c):
        return pl.BlockSpec((r, c), lambda b: (0, 0))

    out_x, out_trend = pl.pallas_call(
        _decoder_layer_kernel,
        out_shape=(jax.ShapeDtypeStruct((B, L, D), jnp.float32),
                   jax.ShapeDtypeStruct((B, L, C), jnp.float32)),
        grid=(B,),
        in_specs=[seq_spec(L, D),            # x
                  seq_spec(S, D),            # cross
                  mat_spec(L, L),            # averaging matrix
                  mat_spec(D, D), mat_spec(D, D), mat_spec(D, D), mat_spec(D, D),
                  mat_spec(D, D), mat_spec(D, D), mat_spec(D, D), mat_spec(D, D),
                  mat_spec(D, F),            # conv1 (1x1)
                  mat_spec(F, D),            # conv2 (1x1)
                  mat_spec(3 * D, C)],       # stacked projection conv taps
        out_specs=(seq_spec(L, D), seq_spec(L, C)),
        compiler_params=pltpu.CompilerParams(
            dimension_semantics=("parallel",)),   # 2x on v7x (2 TCs); free elsewhere
    )(x, cross, avg,
      *params["self_attn"], *params["cross_attn"],
      params["w1"], params["w2"], wproj_stacked)
    return out_x, out_trend


# ----------------------------------------------------------------------------
# Pure-JAX reference (for verification)
# ----------------------------------------------------------------------------

def _ref_attn(q, kv, wq, wk, wv, wo):
    d = q.shape[-1]
    qq, kk, vv = q @ wq, kv @ wk, kv @ wv
    s = jnp.einsum("bqd,bkd->bqk", qq, kk) / math.sqrt(float(d))
    p = jax.nn.softmax(s, axis=-1)
    return q + jnp.einsum("bqk,bkd->bqd", p, vv) @ wo


def _ref_decomp(x, k):
    pad = (k - 1) // 2
    L = x.shape[1]
    front = jnp.repeat(x[:, 0:1, :], pad, axis=1)
    end = jnp.repeat(x[:, -1:, :], pad, axis=1)
    xp = jnp.concatenate([front, x, end], axis=1)
    mean = jnp.mean(jnp.stack([xp[:, j:j + L, :] for j in range(k)], axis=0), axis=0)
    return x - mean, mean


def _ref_forward(params, x, cross, k):
    x = _ref_attn(x, x, *params["self_attn"])
    x, t1 = _ref_decomp(x, k)
    x = _ref_attn(x, cross, *params["cross_attn"])
    x, t2 = _ref_decomp(x, k)
    y = jnp.maximum(x @ params["w1"], 0.0) @ params["w2"]
    x, t3 = _ref_decomp(x + y, k)
    t = t1 + t2 + t3
    prev = jnp.roll(t, 1, axis=1)
    nxt = jnp.roll(t, -1, axis=1)
    trend = prev @ params["wproj"][0] + t @ params["wproj"][1] + nxt @ params["wproj"][2]
    return x, trend


# ----------------------------------------------------------------------------
# main
# ----------------------------------------------------------------------------

if __name__ == "__main__":
    B, L, S = 2, 8, 12           # batch, decoder seq, encoder (cross) seq
    d_model, d_ff, c_out = 32, 128, 8
    moving_avg_k = 25            # module default

    key = jax.random.PRNGKey(0)
    keys = jax.random.split(key, 13)

    def init(k, shape, scale=0.05):
        return jax.random.normal(k, shape, jnp.float32) * scale

    params = {
        "self_attn": tuple(init(keys[i], (d_model, d_model)) for i in range(4)),
        "cross_attn": tuple(init(keys[4 + i], (d_model, d_model)) for i in range(4)),
        "w1": init(keys[8], (d_model, d_ff)),      # conv1 (1x1, no bias) as (D, d_ff)
        "w2": init(keys[9], (d_ff, d_model)),      # conv2 (1x1, no bias) as (d_ff, D)
        # projection Conv1d weight (c_out, d_model, 3) stored as 3 taps of (D, c_out):
        "wproj": init(keys[10], (3, d_model, c_out)),
    }

    x = jax.random.normal(keys[11], (B, L, d_model), jnp.float32)
    cross = jax.random.normal(keys[12], (B, S, d_model), jnp.float32)

    out_x, out_trend = decoder_layer_forward(params, x, cross, moving_avg_k)
    out_x, out_trend = jax.block_until_ready((out_x, out_trend))

    ref_x, ref_trend = _ref_forward(params, x, cross, moving_avg_k)
    assert out_x.shape == (B, L, d_model) and out_trend.shape == (B, L, c_out)
    assert jnp.allclose(out_x, ref_x, atol=2e-2, rtol=2e-2)
    assert jnp.allclose(out_trend, ref_trend, atol=2e-2, rtol=2e-2)

    print("KERNEL_OK")
</pallas_src>

<mosaic_0001>
module attributes {stable_mosaic.version = 11 : i64} {
  func.func @_decoder_layer_kernel(%arg0: i32, %arg1: memref<1x8x32xf32, #tpu.memory_space<vmem>>, %arg2: memref<1x12x32xf32, #tpu.memory_space<vmem>>, %arg3: memref<8x8xf32, #tpu.memory_space<vmem>>, %arg4: memref<32x32xf32, #tpu.memory_space<vmem>>, %arg5: memref<32x32xf32, #tpu.memory_space<vmem>>, %arg6: memref<32x32xf32, #tpu.memory_space<vmem>>, %arg7: memref<32x32xf32, #tpu.memory_space<vmem>>, %arg8: memref<32x32xf32, #tpu.memory_space<vmem>>, %arg9: memref<32x32xf32, #tpu.memory_space<vmem>>, %arg10: memref<32x32xf32, #tpu.memory_space<vmem>>, %arg11: memref<32x32xf32, #tpu.memory_space<vmem>>, %arg12: memref<32x128xf32, #tpu.memory_space<vmem>>, %arg13: memref<128x32xf32, #tpu.memory_space<vmem>>, %arg14: memref<96x8xf32, #tpu.memory_space<vmem>>, %arg15: memref<1x8x32xf32, #tpu.memory_space<vmem>>, %arg16: memref<1x8x8xf32, #tpu.memory_space<vmem>>) attributes {dimension_semantics = [#tpu.dimension_semantics<parallel>], iteration_bounds = array<i64: 2>, scalar_prefetch = 0 : i64, scratch_operands = 0 : i64, tpu.core_type = #tpu.core_type<tc>, window_params = [{transform_indices = @transform_0, window_bounds = array<i64: 1, 8, 32>}, {transform_indices = @transform_1, window_bounds = array<i64: 1, 12, 32>}, {pipeline_mode = #tpu.pipeline_mode<synchronous>, transform_indices = @transform_2, window_bounds = array<i64: 8, 8>}, {pipeline_mode = #tpu.pipeline_mode<synchronous>, transform_indices = @transform_3, window_bounds = array<i64: 32, 32>}, {pipeline_mode = #tpu.pipeline_mode<synchronous>, transform_indices = @transform_4, window_bounds = array<i64: 32, 32>}, {pipeline_mode = #tpu.pipeline_mode<synchronous>, transform_indices = @transform_5, window_bounds = array<i64: 32, 32>}, {pipeline_mode = #tpu.pipeline_mode<synchronous>, transform_indices = @transform_6, window_bounds = array<i64: 32, 32>}, {pipeline_mode = #tpu.pipeline_mode<synchronous>, transform_indices = @transform_7, window_bounds = array<i64: 32, 32>}, {pipeline_mode = #tpu.pipeline_mode<synchronous>, transform_indices = @transform_8, window_bounds = array<i64: 32, 32>}, {pipeline_mode = #tpu.pipeline_mode<synchronous>, transform_indices = @transform_9, window_bounds = array<i64: 32, 32>}, {pipeline_mode = #tpu.pipeline_mode<synchronous>, transform_indices = @transform_10, window_bounds = array<i64: 32, 32>}, {pipeline_mode = #tpu.pipeline_mode<synchronous>, transform_indices = @transform_11, window_bounds = array<i64: 32, 128>}, {pipeline_mode = #tpu.pipeline_mode<synchronous>, transform_indices = @transform_12, window_bounds = array<i64: 128, 32>}, {pipeline_mode = #tpu.pipeline_mode<synchronous>, transform_indices = @transform_13, window_bounds = array<i64: 96, 8>}, {transform_indices = @transform_14, window_bounds = array<i64: 1, 8, 32>}, {transform_indices = @transform_15, window_bounds = array<i64: 1, 8, 8>}]} {
    %c0 = arith.constant 0 : index
    %c0_0 = arith.constant 0 : index
    %c0_1 = arith.constant 0 : index
    %0 = vector.load %arg1[%c0, %c0_0, %c0_1] : memref<1x8x32xf32, #tpu.memory_space<vmem>>, vector<1x8x32xf32>
    %1 = vector.shape_cast %0 : vector<1x8x32xf32> to vector<8x32xf32>
    %c0_2 = arith.constant 0 : index
    %c0_3 = arith.constant 0 : index
    %c0_4 = arith.constant 0 : index
    %2 = vector.load %arg2[%c0_2, %c0_3, %c0_4] : memref<1x12x32xf32, #tpu.memory_space<vmem>>, vector<1x12x32xf32>
    %3 = vector.shape_cast %2 : vector<1x12x32xf32> to vector<12x32xf32>
    %c0_5 = arith.constant 0 : index
    %c0_6 = arith.constant 0 : index
    %4 = vector.load %arg3[%c0_5, %c0_6] : memref<8x8xf32, #tpu.memory_space<vmem>>, vector<8x8xf32>
    %c0_7 = arith.constant 0 : index
    %c0_8 = arith.constant 0 : index
    %5 = vector.load %arg4[%c0_7, %c0_8] : memref<32x32xf32, #tpu.memory_space<vmem>>, vector<32x32xf32>
    %c0_9 = arith.constant 0 : index
    %c0_10 = arith.constant 0 : index
    %6 = vector.load %arg5[%c0_9, %c0_10] : memref<32x32xf32, #tpu.memory_space<vmem>>, vector<32x32xf32>
    %c0_11 = arith.constant 0 : index
    %c0_12 = arith.constant 0 : index
    %7 = vector.load %arg6[%c0_11, %c0_12] : memref<32x32xf32, #tpu.memory_space<vmem>>, vector<32x32xf32>
    %c0_13 = arith.constant 0 : index
    %c0_14 = arith.constant 0 : index
    %8 = vector.load %arg7[%c0_13, %c0_14] : memref<32x32xf32, #tpu.memory_space<vmem>>, vector<32x32xf32>
    %cst = arith.constant dense<0.000000e+00> : vector<8x32xf32>
    %9 = tpu.matmul %1, %5, %cst {dimension_numbers = #tpu.dot_dimension_numbers<[1], [0], [0], [1], [0, 0, 1, 1], [], []>} : vector<8x32xf32>, vector<32x32xf32>, vector<8x32xf32> -> vector<8x32xf32>
    %cst_15 = arith.constant dense<0.000000e+00> : vector<8x32xf32>
    %10 = tpu.matmul %1, %6, %cst_15 {dimension_numbers = #tpu.dot_dimension_numbers<[1], [0], [0], [1], [0, 0, 1, 1], [], []>} : vector<8x32xf32>, vector<32x32xf32>, vector<8x32xf32> -> vector<8x32xf32>
    %cst_16 = arith.constant dense<0.000000e+00> : vector<8x32xf32>
    %11 = tpu.matmul %1, %7, %cst_16 {dimension_numbers = #tpu.dot_dimension_numbers<[1], [0], [0], [1], [0, 0, 1, 1], [], []>} : vector<8x32xf32>, vector<32x32xf32>, vector<8x32xf32> -> vector<8x32xf32>
    %cst_17 = arith.constant dense<0.000000e+00> : vector<8x8xf32>
    %12 = tpu.matmul %9, %10, %cst_17 {dimension_numbers = #tpu.dot_dimension_numbers<[1], [1], [0], [0], [0, 0, 1, 0], [], []>} : vector<8x32xf32>, vector<8x32xf32>, vector<8x8xf32> -> vector<8x8xf32>
    %cst_18 = arith.constant 0.176776692 : f32
    %13 = vector.broadcast %cst_18 : f32 to vector<8x8xf32>
    %14 = arith.mulf %12, %13 : vector<8x8xf32>
    %cst_19 = arith.constant dense<0xFF800000> : vector<8xf32>
    %15 = vector.multi_reduction <maximumf>, %14, %cst_19 [1] : vector<8x8xf32> to vector<8xf32>
    %16 = vector.shape_cast %15 : vector<8xf32> to vector<8x1xf32>
    %17 = vector.broadcast %16 : vector<8x1xf32> to vector<8x8xf32>
    %18 = arith.subf %14, %17 : vector<8x8xf32>
    %19 = math.exp %18 : vector<8x8xf32>
    %cst_20 = arith.constant dense<0.000000e+00> : vector<8xf32>
    %20 = vector.multi_reduction <add>, %19, %cst_20 [1] : vector<8x8xf32> to vector<8xf32>
    %21 = vector.shape_cast %20 : vector<8xf32> to vector<8x1xf32>
    %22 = tpu.reciprocal %21 {approx = true} : vector<8x1xf32> -> vector<8x1xf32>
    %23 = vector.broadcast %22 : vector<8x1xf32> to vector<8x8xf32>
    %24 = arith.mulf %19, %23 : vector<8x8xf32>
    %cst_21 = arith.constant dense<0.000000e+00> : vector<8x32xf32>
    %25 = tpu.matmul %24, %11, %cst_21 {dimension_numbers = #tpu.dot_dimension_numbers<[1], [0], [0], [1], [0, 0, 1, 1], [], []>} : vector<8x8xf32>, vector<8x32xf32>, vector<8x32xf32> -> vector<8x32xf32>
    %cst_22 = arith.constant dense<0.000000e+00> : vector<8x32xf32>
    %26 = tpu.matmul %25, %8, %cst_22 {dimension_numbers = #tpu.dot_dimension_numbers<[1], [0], [0], [1], [0, 0, 1, 1], [], []>} : vector<8x32xf32>, vector<32x32xf32>, vector<8x32xf32> -> vector<8x32xf32>
    %27 = arith.addf %1, %26 : vector<8x32xf32>
    %cst_23 = arith.constant dense<0.000000e+00> : vector<8x32xf32>
    %28 = tpu.matmul %4, %27, %cst_23 {dimension_numbers = #tpu.dot_dimension_numbers<[1], [0], [0], [1], [0, 0, 1, 1], [], []>} : vector<8x8xf32>, vector<8x32xf32>, vector<8x32xf32> -> vector<8x32xf32>
    %29 = arith.subf %27, %28 : vector<8x32xf32>
    %c0_24 = arith.constant 0 : index
    %c0_25 = arith.constant 0 : index
    %30 = vector.load %arg8[%c0_24, %c0_25] : memref<32x32xf32, #tpu.memory_space<vmem>>, vector<32x32xf32>
    %c0_26 = arith.constant 0 : index
    %c0_27 = arith.constant 0 : index
    %31 = vector.load %arg9[%c0_26, %c0_27] : memref<32x32xf32, #tpu.memory_space<vmem>>, vector<32x32xf32>
    %c0_28 = arith.constant 0 : index
    %c0_29 = arith.constant 0 : index
    %32 = vector.load %arg10[%c0_28, %c0_29] : memref<32x32xf32, #tpu.memory_space<vmem>>, vector<32x32xf32>
    %c0_30 = arith.constant 0 : index
    %c0_31 = arith.constant 0 : index
    %33 = vector.load %arg11[%c0_30, %c0_31] : memref<32x32xf32, #tpu.memory_space<vmem>>, vector<32x32xf32>
    %cst_32 = arith.constant dense<0.000000e+00> : vector<8x32xf32>
    %34 = tpu.matmul %29, %30, %cst_32 {dimension_numbers = #tpu.dot_dimension_numbers<[1], [0], [0], [1], [0, 0, 1, 1], [], []>} : vector<8x32xf32>, vector<32x32xf32>, vector<8x32xf32> -> vector<8x32xf32>
    %cst_33 = arith.constant dense<0.000000e+00> : vector<12x32xf32>
    %35 = tpu.matmul %3, %31, %cst_33 {dimension_numbers = #tpu.dot_dimension_numbers<[1], [0], [0], [1], [0, 0, 1, 1], [], []>} : vector<12x32xf32>, vector<32x32xf32>, vector<12x32xf32> -> vector<12x32xf32>
    %cst_34 = arith.constant dense<0.000000e+00> : vector<12x32xf32>
    %36 = tpu.matmul %3, %32, %cst_34 {dimension_numbers = #tpu.dot_dimension_numbers<[1], [0], [0], [1], [0, 0, 1, 1], [], []>} : vector<12x32xf32>, vector<32x32xf32>, vector<12x32xf32> -> vector<12x32xf32>
    %cst_35 = arith.constant dense<0.000000e+00> : vector<8x12xf32>
    %37 = tpu.matmul %34, %35, %cst_35 {dimension_numbers = #tpu.dot_dimension_numbers<[1], [1], [0], [0], [0, 0, 1, 0], [], []>} : vector<8x32xf32>, vector<12x32xf32>, vector<8x12xf32> -> vector<8x12xf32>
    %cst_36 = arith.constant 0.176776692 : f32
    %38 = vector.broadcast %cst_36 : f32 to vector<8x12xf32>
    %39 = arith.mulf %37, %38 : vector<8x12xf32>
    %cst_37 = arith.constant dense<0xFF800000> : vector<8xf32>
    %40 = vector.multi_reduction <maximumf>, %39, %cst_37 [1] : vector<8x12xf32> to vector<8xf32>
    %41 = vector.shape_cast %40 : vector<8xf32> to vector<8x1xf32>
    %42 = vector.broadcast %41 : vector<8x1xf32> to vector<8x12xf32>
    %43 = arith.subf %39, %42 : vector<8x12xf32>
    %44 = math.exp %43 : vector<8x12xf32>
    %cst_38 = arith.constant dense<0.000000e+00> : vector<8xf32>
    %45 = vector.multi_reduction <add>, %44, %cst_38 [1] : vector<8x12xf32> to vector<8xf32>
    %46 = vector.shape_cast %45 : vector<8xf32> to vector<8x1xf32>
    %47 = tpu.reciprocal %46 {approx = true} : vector<8x1xf32> -> vector<8x1xf32>
    %48 = vector.broadcast %47 : vector<8x1xf32> to vector<8x12xf32>
    %49 = arith.mulf %44, %48 : vector<8x12xf32>
    %cst_39 = arith.constant dense<0.000000e+00> : vector<8x32xf32>
    %50 = tpu.matmul %49, %36, %cst_39 {dimension_numbers = #tpu.dot_dimension_numbers<[1], [0], [0], [1], [0, 0, 1, 1], [], []>} : vector<8x12xf32>, vector<12x32xf32>, vector<8x32xf32> -> vector<8x32xf32>
    %cst_40 = arith.constant dense<0.000000e+00> : vector<8x32xf32>
    %51 = tpu.matmul %50, %33, %cst_40 {dimension_numbers = #tpu.dot_dimension_numbers<[1], [0], [0], [1], [0, 0, 1, 1], [], []>} : vector<8x32xf32>, vector<32x32xf32>, vector<8x32xf32> -> vector<8x32xf32>
    %52 = arith.addf %29, %51 : vector<8x32xf32>
    %cst_41 = arith.constant dense<0.000000e+00> : vector<8x32xf32>
    %53 = tpu.matmul %4, %52, %cst_41 {dimension_numbers = #tpu.dot_dimension_numbers<[1], [0], [0], [1], [0, 0, 1, 1], [], []>} : vector<8x8xf32>, vector<8x32xf32>, vector<8x32xf32> -> vector<8x32xf32>
    %54 = arith.subf %52, %53 : vector<8x32xf32>
    %c0_42 = arith.constant 0 : index
    %c0_43 = arith.constant 0 : index
    %55 = vector.load %arg12[%c0_42, %c0_43] : memref<32x128xf32, #tpu.memory_space<vmem>>, vector<32x128xf32>
    %cst_44 = arith.constant dense<0.000000e+00> : vector<8x128xf32>
    %56 = tpu.matmul %54, %55, %cst_44 {dimension_numbers = #tpu.dot_dimension_numbers<[1], [0], [0], [1], [0, 0, 1, 1], [], []>} : vector<8x32xf32>, vector<32x128xf32>, vector<8x128xf32> -> vector<8x128xf32>
    %cst_45 = arith.constant 0.000000e+00 : f32
    %57 = vector.broadcast %cst_45 : f32 to vector<8x128xf32>
    %58 = arith.maximumf %56, %57 : vector<8x128xf32>
    %c0_46 = arith.constant 0 : index
    %c0_47 = arith.constant 0 : index
    %59 = vector.load %arg13[%c0_46, %c0_47] : memref<128x32xf32, #tpu.memory_space<vmem>>, vector<128x32xf32>
    %cst_48 = arith.constant dense<0.000000e+00> : vector<8x32xf32>
    %60 = tpu.matmul %58, %59, %cst_48 {dimension_numbers = #tpu.dot_dimension_numbers<[1], [0], [0], [1], [0, 0, 1, 1], [], []>} : vector<8x128xf32>, vector<128x32xf32>, vector<8x32xf32> -> vector<8x32xf32>
    %61 = arith.addf %54, %60 : vector<8x32xf32>
    %cst_49 = arith.constant dense<0.000000e+00> : vector<8x32xf32>
    %62 = tpu.matmul %4, %61, %cst_49 {dimension_numbers = #tpu.dot_dimension_numbers<[1], [0], [0], [1], [0, 0, 1, 1], [], []>} : vector<8x8xf32>, vector<8x32xf32>, vector<8x32xf32> -> vector<8x32xf32>
    %63 = arith.subf %61, %62 : vector<8x32xf32>
    %c0_50 = arith.constant 0 : index
    %c0_51 = arith.constant 0 : index
    %c0_52 = arith.constant 0 : index
    %64 = vector.load %arg15[%c0_50, %c0_51, %c0_52] : memref<1x8x32xf32, #tpu.memory_space<vmem>>, vector<1x8x32xf32>
    %65 = vector.shape_cast %64 : vector<1x8x32xf32> to vector<8x32xf32>
    %66 = vector.shape_cast %63 : vector<8x32xf32> to vector<1x8x32xf32>
    tpu.vector_store %arg15[%c0_50, %c0_51, %c0_52], %66 {strides = array<i32>} : memref<1x8x32xf32, #tpu.memory_space<vmem>>, vector<1x8x32xf32>,
    %67 = arith.addf %28, %53 : vector<8x32xf32>
    %68 = arith.addf %67, %62 : vector<8x32xf32>
    %c1_i32 = arith.constant 1 : i32
    %69 = tpu.dynamic_rotate %68 by %c1_i32 dim 0 : vector<8x32xf32>, i32 -> vector<8x32xf32>
    %c7_i32 = arith.constant 7 : i32
    %70 = tpu.dynamic_rotate %68 by %c7_i32 dim 0 : vector<8x32xf32>, i32 -> vector<8x32xf32>
    %71 = tpu.concatenate %69, %68, %70 in 1 : vector<8x32xf32>, vector<8x32xf32>, vector<8x32xf32> -> vector<8x96xf32>
    %c0_53 = arith.constant 0 : index
    %c0_54 = arith.constant 0 : index
    %72 = vector.load %arg14[%c0_53, %c0_54] : memref<96x8xf32, #tpu.memory_space<vmem>>, vector<96x8xf32>
    %cst_55 = arith.constant dense<0.000000e+00> : vector<8x8xf32>
    %73 = tpu.matmul %71, %72, %cst_55 {dimension_numbers = #tpu.dot_dimension_numbers<[1], [0], [0], [1], [0, 0, 1, 1], [], []>} : vector<8x96xf32>, vector<96x8xf32>, vector<8x8xf32> -> vector<8x8xf32>
    %c0_56 = arith.constant 0 : index
    %c0_57 = arith.constant 0 : index
    %c0_58 = arith.constant 0 : index
    %74 = vector.load %arg16[%c0_56, %c0_57, %c0_58] : memref<1x8x8xf32, #tpu.memory_space<vmem>>, vector<1x8x8xf32>
    %75 = vector.shape_cast %74 : vector<1x8x8xf32> to vector<8x8xf32>
    %76 = vector.shape_cast %73 : vector<8x8xf32> to vector<1x8x8xf32>
    tpu.vector_store %arg16[%c0_56, %c0_57, %c0_58], %76 {strides = array<i32>} : memref<1x8x8xf32, #tpu.memory_space<vmem>>, vector<1x8x8xf32>,
    return
  }
  func.func @transform_0(%arg0: i32) -> (i32, i32, i32) {
    %c0_i32 = arith.constant 0 : i32
    %c0_i32_0 = arith.constant 0 : i32
    %c0_i32_1 = arith.constant 0 : i32
    return %arg0, %c0_i32, %c0_i32_0 : i32, i32, i32
  }
  func.func @transform_1(%arg0: i32) -> (i32, i32, i32) {
    %c0_i32 = arith.constant 0 : i32
    %c0_i32_0 = arith.constant 0 : i32
    %c0_i32_1 = arith.constant 0 : i32
    return %arg0, %c0_i32, %c0_i32_0 : i32, i32, i32
  }
  func.func @transform_2(%arg0: i32) -> (i32, i32) {
    %c0_i32 = arith.constant 0 : i32
    %c0_i32_0 = arith.constant 0 : i32
    %c0_i32_1 = arith.constant 0 : i32
    return %c0_i32, %c0_i32_0 : i32, i32
  }
  func.func @transform_3(%arg0: i32) -> (i32, i32) {
    %c0_i32 = arith.constant 0 : i32
    %c0_i32_0 = arith.constant 0 : i32
    %c0_i32_1 = arith.constant 0 : i32
    return %c0_i32, %c0_i32_0 : i32, i32
  }
  func.func @transform_4(%arg0: i32) -> (i32, i32) {
    %c0_i32 = arith.constant 0 : i32
    %c0_i32_0 = arith.constant 0 : i32
    %c0_i32_1 = arith.constant 0 : i32
    return %c0_i32, %c0_i32_0 : i32, i32
  }
  func.func @transform_5(%arg0: i32) -> (i32, i32) {
    %c0_i32 = arith.constant 0 : i32
    %c0_i32_0 = arith.constant 0 : i32
    %c0_i32_1 = arith.constant 0 : i32
    return %c0_i32, %c0_i32_0 : i32, i32
  }
  func.func @transform_6(%arg0: i32) -> (i32, i32) {
    %c0_i32 = arith.constant 0 : i32
    %c0_i32_0 = arith.constant 0 : i32
    %c0_i32_1 = arith.constant 0 : i32
    return %c0_i32, %c0_i32_0 : i32, i32
  }
  func.func @transform_7(%arg0: i32) -> (i32, i32) {
    %c0_i32 = arith.constant 0 : i32
    %c0_i32_0 = arith.constant 0 : i32
    %c0_i32_1 = arith.constant 0 : i32
    return %c0_i32, %c0_i32_0 : i32, i32
  }
  func.func @transform_8(%arg0: i32) -> (i32, i32) {
    %c0_i32 = arith.constant 0 : i32
    %c0_i32_0 = arith.constant 0 : i32
    %c0_i32_1 = arith.constant 0 : i32
    return %c0_i32, %c0_i32_0 : i32, i32
  }
  func.func @transform_9(%arg0: i32) -> (i32, i32) {
    %c0_i32 = arith.constant 0 : i32
    %c0_i32_0 = arith.constant 0 : i32
    %c0_i32_1 = arith.constant 0 : i32
    return %c0_i32, %c0_i32_0 : i32, i32
  }
  func.func @transform_10(%arg0: i32) -> (i32, i32) {
    %c0_i32 = arith.constant 0 : i32
    %c0_i32_0 = arith.constant 0 : i32
    %c0_i32_1 = arith.constant 0 : i32
    return %c0_i32, %c0_i32_0 : i32, i32
  }
  func.func @transform_11(%arg0: i32) -> (i32, i32) {
    %c0_i32 = arith.constant 0 : i32
    %c0_i32_0 = arith.constant 0 : i32
    %c0_i32_1 = arith.constant 0 : i32
    return %c0_i32, %c0_i32_0 : i32, i32
  }
  func.func @transform_12(%arg0: i32) -> (i32, i32) {
    %c0_i32 = arith.constant 0 : i32
    %c0_i32_0 = arith.constant 0 : i32
    %c0_i32_1 = arith.constant 0 : i32
    return %c0_i32, %c0_i32_0 : i32, i32
  }
  func.func @transform_13(%arg0: i32) -> (i32, i32) {
    %c0_i32 = arith.constant 0 : i32
    %c0_i32_0 = arith.constant 0 : i32
    %c0_i32_1 = arith.constant 0 : i32
    return %c0_i32, %c0_i32_0 : i32, i32
  }
  func.func @transform_14(%arg0: i32) -> (i32, i32, i32) {
    %c0_i32 = arith.constant 0 : i32
    %c0_i32_0 = arith.constant 0 : i32
    %c0_i32_1 = arith.constant 0 : i32
    return %arg0, %c0_i32, %c0_i32_0 : i32, i32, i32
  }
  func.func @transform_15(%arg0: i32) -> (i32, i32, i32) {
    %c0_i32 = arith.constant 0 : i32
    %c0_i32_0 = arith.constant 0 : i32
    %c0_i32_1 = arith.constant 0 : i32
    return %arg0, %c0_i32, %c0_i32_0 : i32, i32, i32
  }
}

</mosaic_0001>

<llo_original>
// kernel: tpu_custom_call.1
$region0: #{tpu_custom_call.1}
  #allocation0 [shape = 'u32[]', space=smem, size = 0x4, offset = 0x4, fixed_abs, tag = 'smem constant byte address 0x4 - core index']
  #allocation1 [shape = 'u32[144,128]{1,0:T(1,128)}', space=vmem, size = 0x12000, scoped, tag = 'internal scratch']
  %s0 = inlined_call_operand.hbm [shape: f32[2,8,32], index: 0, kind: input, shape index: {}]
  %s1 = inlined_call_operand.vmem [shape: f32[2,12,32], index: 1, kind: input, shape index: {}]
  %s2 = inlined_call_operand.hbm [shape: f32[8,8], index: 2, kind: input, shape index: {}]
  %s3 = inlined_call_operand.vmem [shape: f32[32,32], index: 3, kind: input, shape index: {}]
  %s4 = inlined_call_operand.vmem [shape: f32[32,32], index: 4, kind: input, shape index: {}]
  %s5 = inlined_call_operand.vmem [shape: f32[32,32], index: 5, kind: input, shape index: {}]
  %s6 = inlined_call_operand.vmem [shape: f32[32,32], index: 6, kind: input, shape index: {}]
  %s7 = inlined_call_operand.vmem [shape: f32[32,32], index: 7, kind: input, shape index: {}]
  %s8 = inlined_call_operand.vmem [shape: f32[32,32], index: 8, kind: input, shape index: {}]
  %s9 = inlined_call_operand.vmem [shape: f32[32,32], index: 9, kind: input, shape index: {}]
  %s10 = inlined_call_operand.vmem [shape: f32[32,32], index: 10, kind: input, shape index: {}]
  %s11 = inlined_call_operand.vmem [shape: f32[32,128], index: 11, kind: input, shape index: {}]
  %s12 = inlined_call_operand.vmem [shape: f32[128,32], index: 12, kind: input, shape index: {}]
  %s13 = inlined_call_operand.vmem [shape: f32[96,8], index: 13, kind: input, shape index: {}]
  %s14 = inlined_call_operand.hbm [shape: f32[2,8,32], index: 14, kind: output, shape index: {0}]
  %s15 = inlined_call_operand.hbm [shape: f32[2,8,8], index: 15, kind: output, shape index: {1}]
  %16 = xla_tuple %s14, %s15
  %s17 = sld [smem:[#allocation0]]
  $region105: #{tpu_custom_call.1} parent=0
    _
  %s19 = ssub.s32 1, %s17
  %s20 = scalar_select 0, %s19, %s17
  $region1: #{tpu_custom_call.1} parent=0
    #allocation2 [shape = 'u8[8192]{0}', space=vmem, size = 0x2000, scoped, tag = 'input window, operand 0']
    #allocation3 [shape = 's32[2]{0}', space=sflag, size = 0x8, scoped, tag = 'scoped memory for tpu_custom_call.1']
    #allocation4 [shape = 's32[2]{0}', space=sflag, size = 0x8, scoped, tag = 'scoped memory for tpu_custom_call.1']
    #allocation5 [shape = 'u8[4096]{0}', space=vmem, size = 0x1000, scoped, tag = 'input window, operand 2, single buffered']
    #allocation6 [shape = 's32[1]{0}', space=sflag, size = 0x4, scoped, tag = 'scoped memory for tpu_custom_call.1']
    #allocation7 [shape = 'u8[8192]{0}', space=vmem, size = 0x2000, scoped, tag = 'output window, operand 0']
    #allocation8 [shape = 'u8[8192]{0}', space=vmem, size = 0x2000, scoped, tag = 'output window, operand 1']
    #allocation9 [shape = 's32[2]{0}', space=sflag, size = 0x8, scoped, tag = 'scoped memory for tpu_custom_call.1']
    %21 = vsyncpa [#allocation3], 0
    %s22 = scalar_lea.sflag [#allocation3], 1
    %23 = vsyncpa %s22, 0
    %24 = vsyncpa [#allocation6], 0
    %25 = vsyncpa [#allocation4], 0
    %s26 = scalar_lea.sflag [#allocation4], 1
    %27 = vsyncpa %s26, 0
    %28 = vsyncpa [#allocation9], 0
    %s29 = scalar_lea.sflag [#allocation9], 1
    %30 = vsyncpa %s29, 0
    loop: start=0, step=1, limit=4
    $region2: #{tpu_custom_call.1} parent=1 // loop_pre_header
      _
    $region3: #{tpu_custom_call.1} parent=1 // loop_header
      %s32 = sphi 0, %s36
      %p33 = scmp.ge.s32.totalorder %s32, 4
      %s42 = sphi 0, %s44
      %s45 = sphi 0, %s42
      %s46 = sphi 0, %s45
      %s62 = sphi 0, %s46
      %s68 = sphi 0, %s70
      %s71 = sphi 0, %s68
      %s72 = sphi 0, %s71
      %s88 = sphi 0, %s72
      %s92 = sphi 0, %s92
      %s94 = sphi 0, %s92
      %s95 = sphi 0, %s94
      %s109 = sphi 0, %s95
      %s113 = sphi 0, %s113
      %s115 = sphi 0, %s113
      %s116 = sphi 0, %s115
      %s130 = sphi 0, %s116
      %s134 = sphi 0, %s134
      %s136 = sphi 0, %s134
      %s137 = sphi 0, %s136
      %s151 = sphi 0, %s137
      %s155 = sphi 0, %s155
      %s157 = sphi 0, %s155
      %s158 = sphi 0, %s157
      %s172 = sphi 0, %s158
      %s176 = sphi 0, %s176
      %s178 = sphi 0, %s176
      %s179 = sphi 0, %s178
      %s193 = sphi 0, %s179
      %s197 = sphi 0, %s197
      %s199 = sphi 0, %s197
      %s200 = sphi 0, %s199
      %s214 = sphi 0, %s200
      %s218 = sphi 0, %s218
      %s220 = sphi 0, %s218
      %s221 = sphi 0, %s220
      %s235 = sphi 0, %s221
      %s239 = sphi 0, %s239
      %s241 = sphi 0, %s239
      %s242 = sphi 0, %s241
      %s256 = sphi 0, %s242
      %s260 = sphi 0, %s260
      %s262 = sphi 0, %s260
      %s263 = sphi 0, %s262
      %s277 = sphi 0, %s263
      %s281 = sphi 0, %s281
      %s283 = sphi 0, %s281
      %s284 = sphi 0, %s283
      %s298 = sphi 0, %s284
      %s302 = sphi 0, %s302
      %s304 = sphi 0, %s302
      %s305 = sphi 0, %s304
      %s319 = sphi 0, %s305
      %s323 = sphi 0, %s323
      %s325 = sphi 0, %s323
      %s326 = sphi 0, %s325
      %s340 = sphi 0, %s326
      %s346 = sphi 0, %s348
      %s349 = sphi 0, %s346
      %s350 = sphi 0, %s349
      %s366 = sphi 0, %s350
      %s372 = sphi 0, %s374
      %s375 = sphi 0, %s372
      %s376 = sphi 0, %s375
      %s392 = sphi 0, %s376
    $region4: #{tpu_custom_call.1} parent=1 // loop_header_branch
      %35 = sbr.rel (%p33) target = $region8
    $region5: #{tpu_custom_call.1} parent=1 // loop_body
      %s37 = ssub.s32 %s32, 1
      %s38 = ssub.s32 %s32, 2
      %s39 = sadd.s32 %s32, 1
      %s40 = ssub.s32 %s32, %s39
      %p41 = scmp.eq.s32.totalorder %s40, 0
      %s43 = sadd.s32 %s42, 1
      %s44 = scalar_select %p41, %s42, %s43
      %p47 = pneg %p41
      %p48 = scmp.eq.s32.totalorder %s32, 1
      %p49 = por %p47, %p48
      %p50 = scmp.ne.s32.totalorder %s42, %s45
      %p51 = scmp.eq.s32.totalorder %s32, 0
      %p52 = por %p50, %p51
      %p53 = scmp.ne.s32.totalorder %s42, %s45
      %p54 = scmp.eq.s32.totalorder %s37, 1
      %p55 = por %p53, %p54
      %p56 = scmp.ne.s32.totalorder %s45, %s46
      %p57 = scmp.eq.s32.totalorder %s37, 0
      %p58 = por %p56, %p57
      %p59 = scmp.ne.s32.totalorder %s45, %s46
      %p60 = scmp.eq.s32.totalorder %s38, 1
      %p61 = por %p59, %p60
      %p63 = scmp.ne.s32.totalorder %s46, %s62
      %p64 = scmp.eq.s32.totalorder %s38, 0
      %p65 = por %p63, %p64
      %s66 = ssub.s32 %s32, %s39
      %p67 = scmp.eq.s32.totalorder %s66, 0
      %s69 = sadd.s32 %s68, 1
      %s70 = scalar_select %p67, %s68, %s69
      %p73 = pneg %p67
      %p74 = scmp.eq.s32.totalorder %s32, 1
      %p75 = por %p73, %p74
      %p76 = scmp.ne.s32.totalorder %s68, %s71
      %p77 = scmp.eq.s32.totalorder %s32, 0
      %p78 = por %p76, %p77
      %p79 = scmp.ne.s32.totalorder %s68, %s71
      %p80 = scmp.eq.s32.totalorder %s37, 1
      %p81 = por %p79, %p80
      %p82 = scmp.ne.s32.totalorder %s71, %s72
      %p83 = scmp.eq.s32.totalorder %s37, 0
      %p84 = por %p82, %p83
      %p85 = scmp.ne.s32.totalorder %s71, %s72
      %p86 = scmp.eq.s32.totalorder %s38, 1
      %p87 = por %p85, %p86
      %p89 = scmp.ne.s32.totalorder %s72, %s88
      %p90 = scmp.eq.s32.totalorder %s38, 0
      %p91 = por %p89, %p90
      %s93 = sadd.s32 %s92, 1
      %p96 = scmp.eq.s32.totalorder %s32, 1
      %p97 = scmp.ne.s32.totalorder %s92, %s94
      %p98 = scmp.eq.s32.totalorder %s32, 0
      %p99 = por %p97, %p98
      %p100 = scmp.ne.s32.totalorder %s92, %s94
      %p101 = scmp.eq.s32.totalorder %s37, 1
      %p102 = por %p100, %p101
      %p103 = scmp.ne.s32.totalorder %s94, %s95
      %p104 = scmp.eq.s32.totalorder %s37, 0
      %p105 = por %p103, %p104
      %p106 = scmp.ne.s32.totalorder %s94, %s95
      %p107 = scmp.eq.s32.totalorder %s38, 1
      %p108 = por %p106, %p107
      %p110 = scmp.ne.s32.totalorder %s95, %s109
      %p111 = scmp.eq.s32.totalorder %s38, 0
      %p112 = por %p110, %p111
      %s114 = sadd.s32 %s113, 1
      %p117 = scmp.eq.s32.totalorder %s32, 1
      %p118 = scmp.ne.s32.totalorder %s113, %s115
      %p119 = scmp.eq.s32.totalorder %s32, 0
      %p120 = por %p118, %p119
      %p121 = scmp.ne.s32.totalorder %s113, %s115
      %p122 = scmp.eq.s32.totalorder %s37, 1
      %p123 = por %p121, %p122
      %p124 = scmp.ne.s32.totalorder %s115, %s116
      %p125 = scmp.eq.s32.totalorder %s37, 0
      %p126 = por %p124, %p125
      %p127 = scmp.ne.s32.totalorder %s115, %s116
      %p128 = scmp.eq.s32.totalorder %s38, 1
      %p129 = por %p127, %p128
      %p131 = scmp.ne.s32.totalorder %s116, %s130
      %p132 = scmp.eq.s32.totalorder %s38, 0
      %p133 = por %p131, %p132
      %s135 = sadd.s32 %s134, 1
      %p138 = scmp.eq.s32.totalorder %s32, 1
      %p139 = scmp.ne.s32.totalorder %s134, %s136
      %p140 = scmp.eq.s32.totalorder %s32, 0
      %p141 = por %p139, %p140
      %p142 = scmp.ne.s32.totalorder %s134, %s136
      %p143 = scmp.eq.s32.totalorder %s37, 1
      %p144 = por %p142, %p143
      %p145 = scmp.ne.s32.totalorder %s136, %s137
      %p146 = scmp.eq.s32.totalorder %s37, 0
      %p147 = por %p145, %p146
      %p148 = scmp.ne.s32.totalorder %s136, %s137
      %p149 = scmp.eq.s32.totalorder %s38, 1
      %p150 = por %p148, %p149
      %p152 = scmp.ne.s32.totalorder %s137, %s151
      %p153 = scmp.eq.s32.totalorder %s38, 0
      %p154 = por %p152, %p153
      %s156 = sadd.s32 %s155, 1
      %p159 = scmp.eq.s32.totalorder %s32, 1
      %p160 = scmp.ne.s32.totalorder %s155, %s157
      %p161 = scmp.eq.s32.totalorder %s32, 0
      %p162 = por %p160, %p161
      %p163 = scmp.ne.s32.totalorder %s155, %s157
      %p164 = scmp.eq.s32.totalorder %s37, 1
      %p165 = por %p163, %p164
      %p166 = scmp.ne.s32.totalorder %s157, %s158
      %p167 = scmp.eq.s32.totalorder %s37, 0
      %p168 = por %p166, %p167
      %p169 = scmp.ne.s32.totalorder %s157, %s158
      %p170 = scmp.eq.s32.totalorder %s38, 1
      %p171 = por %p169, %p170
      %p173 = scmp.ne.s32.totalorder %s158, %s172
      %p174 = scmp.eq.s32.totalorder %s38, 0
      %p175 = por %p173, %p174
      %s177 = sadd.s32 %s176, 1
      %p180 = scmp.eq.s32.totalorder %s32, 1
      %p181 = scmp.ne.s32.totalorder %s176, %s178
      %p182 = scmp.eq.s32.totalorder %s32, 0
      %p183 = por %p181, %p182
      %p184 = scmp.ne.s32.totalorder %s176, %s178
      %p185 = scmp.eq.s32.totalorder %s37, 1
      %p186 = por %p184, %p185
      %p187 = scmp.ne.s32.totalorder %s178, %s179
      %p188 = scmp.eq.s32.totalorder %s37, 0
      %p189 = por %p187, %p188
      %p190 = scmp.ne.s32.totalorder %s178, %s179
      %p191 = scmp.eq.s32.totalorder %s38, 1
      %p192 = por %p190, %p191
      %p194 = scmp.ne.s32.totalorder %s179, %s193
      %p195 = scmp.eq.s32.totalorder %s38, 0
      %p196 = por %p194, %p195
      %s198 = sadd.s32 %s197, 1
      %p201 = scmp.eq.s32.totalorder %s32, 1
      %p202 = scmp.ne.s32.totalorder %s197, %s199
      %p203 = scmp.eq.s32.totalorder %s32, 0
      %p204 = por %p202, %p203
      %p205 = scmp.ne.s32.totalorder %s197, %s199
      %p206 = scmp.eq.s32.totalorder %s37, 1
      %p207 = por %p205, %p206
      %p208 = scmp.ne.s32.totalorder %s199, %s200
      %p209 = scmp.eq.s32.totalorder %s37, 0
      %p210 = por %p208, %p209
      %p211 = scmp.ne.s32.totalorder %s199, %s200
      %p212 = scmp.eq.s32.totalorder %s38, 1
      %p213 = por %p211, %p212
      %p215 = scmp.ne.s32.totalorder %s200, %s214
      %p216 = scmp.eq.s32.totalorder %s38, 0
      %p217 = por %p215, %p216
      %s219 = sadd.s32 %s218, 1
      %p222 = scmp.eq.s32.totalorder %s32, 1
      %p223 = scmp.ne.s32.totalorder %s218, %s220
      %p224 = scmp.eq.s32.totalorder %s32, 0
      %p225 = por %p223, %p224
      %p226 = scmp.ne.s32.totalorder %s218, %s220
      %p227 = scmp.eq.s32.totalorder %s37, 1
      %p228 = por %p226, %p227
      %p229 = scmp.ne.s32.totalorder %s220, %s221
      %p230 = scmp.eq.s32.totalorder %s37, 0
      %p231 = por %p229, %p230
      %p232 = scmp.ne.s32.totalorder %s220, %s221
      %p233 = scmp.eq.s32.totalorder %s38, 1
      %p234 = por %p232, %p233
      %p236 = scmp.ne.s32.totalorder %s221, %s235
      %p237 = scmp.eq.s32.totalorder %s38, 0
      %p238 = por %p236, %p237
      %s240 = sadd.s32 %s239, 1
      %p243 = scmp.eq.s32.totalorder %s32, 1
      %p244 = scmp.ne.s32.totalorder %s239, %s241
      %p245 = scmp.eq.s32.totalorder %s32, 0
      %p246 = por %p244, %p245
      %p247 = scmp.ne.s32.totalorder %s239, %s241
      %p248 = scmp.eq.s32.totalorder %s37, 1
      %p249 = por %p247, %p248
      %p250 = scmp.ne.s32.totalorder %s241, %s242
      %p251 = scmp.eq.s32.totalorder %s37, 0
      %p252 = por %p250, %p251
      %p253 = scmp.ne.s32.totalorder %s241, %s242
      %p254 = scmp.eq.s32.totalorder %s38, 1
      %p255 = por %p253, %p254
      %p257 = scmp.ne.s32.totalorder %s242, %s256
      %p258 = scmp.eq.s32.totalorder %s38, 0
      %p259 = por %p257, %p258
      %s261 = sadd.s32 %s260, 1
      %p264 = scmp.eq.s32.totalorder %s32, 1
      %p265 = scmp.ne.s32.totalorder %s260, %s262
      %p266 = scmp.eq.s32.totalorder %s32, 0
      %p267 = por %p265, %p266
      %p268 = scmp.ne.s32.totalorder %s260, %s262
      %p269 = scmp.eq.s32.totalorder %s37, 1
      %p270 = por %p268, %p269
      %p271 = scmp.ne.s32.totalorder %s262, %s263
      %p272 = scmp.eq.s32.totalorder %s37, 0
      %p273 = por %p271, %p272
      %p274 = scmp.ne.s32.totalorder %s262, %s263
      %p275 = scmp.eq.s32.totalorder %s38, 1
      %p276 = por %p274, %p275
      %p278 = scmp.ne.s32.totalorder %s263, %s277
      %p279 = scmp.eq.s32.totalorder %s38, 0
      %p280 = por %p278, %p279
      %s282 = sadd.s32 %s281, 1
      %p285 = scmp.eq.s32.totalorder %s32, 1
      %p286 = scmp.ne.s32.totalorder %s281, %s283
      %p287 = scmp.eq.s32.totalorder %s32, 0
      %p288 = por %p286, %p287
      %p289 = scmp.ne.s32.totalorder %s281, %s283
      %p290 = scmp.eq.s32.totalorder %s37, 1
      %p291 = por %p289, %p290
      %p292 = scmp.ne.s32.totalorder %s283, %s284
      %p293 = scmp.eq.s32.totalorder %s37, 0
      %p294 = por %p292, %p293
      %p295 = scmp.ne.s32.totalorder %s283, %s284
      %p296 = scmp.eq.s32.totalorder %s38, 1
      %p297 = por %p295, %p296
      %p299 = scmp.ne.s32.totalorder %s284, %s298
      %p300 = scmp.eq.s32.totalorder %s38, 0
      %p301 = por %p299, %p300
      %s303 = sadd.s32 %s302, 1
      %p306 = scmp.eq.s32.totalorder %s32, 1
      %p307 = scmp.ne.s32.totalorder %s302, %s304
      %p308 = scmp.eq.s32.totalorder %s32, 0
      %p309 = por %p307, %p308
      %p310 = scmp.ne.s32.totalorder %s302, %s304
      %p311 = scmp.eq.s32.totalorder %s37, 1
      %p312 = por %p310, %p311
      %p313 = scmp.ne.s32.totalorder %s304, %s305
      %p314 = scmp.eq.s32.totalorder %s37, 0
      %p315 = por %p313, %p314
      %p316 = scmp.ne.s32.totalorder %s304, %s305
      %p317 = scmp.eq.s32.totalorder %s38, 1
      %p318 = por %p316, %p317
      %p320 = scmp.ne.s32.totalorder %s305, %s319
      %p321 = scmp.eq.s32.totalorder %s38, 0
      %p322 = por %p320, %p321
      %s324 = sadd.s32 %s323, 1
      %p327 = scmp.eq.s32.totalorder %s32, 1
      %p328 = scmp.ne.s32.totalorder %s323, %s325
      %p329 = scmp.eq.s32.totalorder %s32, 0
      %p330 = por %p328, %p329
      %p331 = scmp.ne.s32.totalorder %s323, %s325
      %p332 = scmp.eq.s32.totalorder %s37, 1
      %p333 = por %p331, %p332
      %p334 = scmp.ne.s32.totalorder %s325, %s326
      %p335 = scmp.eq.s32.totalorder %s37, 0
      %p336 = por %p334, %p335
      %p337 = scmp.ne.s32.totalorder %s325, %s326
      %p338 = scmp.eq.s32.totalorder %s38, 1
      %p339 = por %p337, %p338
      %p341 = scmp.ne.s32.totalorder %s326, %s340
      %p342 = scmp.eq.s32.totalorder %s38, 0
      %p343 = por %p341, %p342
      %s344 = ssub.s32 %s32, %s39
      %p345 = scmp.eq.s32.totalorder %s344, 0
      %s347 = sadd.s32 %s346, 1
      %s348 = scalar_select %p345, %s346, %s347
      %p351 = pneg %p345
      %p352 = scmp.eq.s32.totalorder %s32, 1
      %p353 = por %p351, %p352
      %p354 = scmp.ne.s32.totalorder %s346, %s349
      %p355 = scmp.eq.s32.totalorder %s32, 0
      %p356 = por %p354, %p355
      %p357 = scmp.ne.s32.totalorder %s346, %s349
      %p358 = scmp.eq.s32.totalorder %s37, 1
      %p359 = por %p357, %p358
      %p360 = scmp.ne.s32.totalorder %s349, %s350
      %p361 = scmp.eq.s32.totalorder %s37, 0
      %p362 = por %p360, %p361
      %p363 = scmp.ne.s32.totalorder %s349, %s350
      %p364 = scmp.eq.s32.totalorder %s38, 1
      %p365 = por %p363, %p364
      %p367 = scmp.ne.s32.totalorder %s350, %s366
      %p368 = scmp.eq.s32.totalorder %s38, 0
      %p369 = por %p367, %p368
      %s370 = ssub.s32 %s32, %s39
      %p371 = scmp.eq.s32.totalorder %s370, 0
      %s373 = sadd.s32 %s372, 1
      %s374 = scalar_select %p371, %s372, %s373
      %p377 = pneg %p371
      %p378 = scmp.eq.s32.totalorder %s32, 1
      %p379 = por %p377, %p378
      %p380 = scmp.ne.s32.totalorder %s372, %s375
      %p381 = scmp.eq.s32.totalorder %s32, 0
      %p382 = por %p380, %p381
      %p383 = scmp.ne.s32.totalorder %s372, %s375
      %p384 = scmp.eq.s32.totalorder %s37, 1
      %p385 = por %p383, %p384
      %p386 = scmp.ne.s32.totalorder %s375, %s376
      %p387 = scmp.eq.s32.totalorder %s37, 0
      %p388 = por %p386, %p387
      %p389 = scmp.ne.s32.totalorder %s375, %s376
      %p390 = scmp.eq.s32.totalorder %s38, 1
      %p391 = por %p389, %p390
      %p393 = scmp.ne.s32.totalorder %s376, %s392
      %p394 = scmp.eq.s32.totalorder %s38, 0
      %p395 = por %p393, %p394
      %p396 = scmp.le.s32.totalorder 1, %s32
      %p397 = scmp.lt.s32.totalorder %s32, 3
      %p398 = pnand %p396, %p397
      %p399 = pneg %p398
      // Predicated region
      $region9: #{tpu_custom_call.1} parent=5 // pred_check
        _
      $region10: #{tpu_custom_call.1} parent=5 // pred_check_branch
        %401 = sbr.rel (%p398) target = $region12
      $region11: #{tpu_custom_call.1} parent=5 // pred_region
        %s402 = ssub.s32 %s32, 1
        // Predicated region
        $region13: #{tpu_custom_call.1} parent=11 // pred_check
          %p403 = pneg %p105
        $region14: #{tpu_custom_call.1} parent=11 // pred_check_branch
          %405 = sbr.rel (%p403) target = $region16
        $region15: #{tpu_custom_call.1} parent=11 // pred_region
          %s407 = ssub.s32 128, 128
          %408 = vsyncadd [#allocation6], %s407
          %s410 = sshll.u32 [#allocation5], 4
          %s411 = int_to_ptr.vmem [resolvable:$true] %s410
          %413 = dma.hbm_to_vmem [thread:$0]  %s2, 128, %s411, [#allocation6]
        $region16: #{tpu_custom_call.1} parent=11 // pred_fallthru
          _
        // Predicated region
        $region17: #{tpu_custom_call.1} parent=11 // pred_check
          %p414 = pneg %p126
        $region18: #{tpu_custom_call.1} parent=11 // pred_check_branch
          %416 = sbr.rel (%p414) target = $region20
        $region19: #{tpu_custom_call.1} parent=11 // pred_region
          _
        $region20: #{tpu_custom_call.1} parent=11 // pred_fallthru
          _
        // Predicated region
        $region21: #{tpu_custom_call.1} parent=11 // pred_check
          %p417 = pneg %p147
        $region22: #{tpu_custom_call.1} parent=11 // pred_check_branch
          %419 = sbr.rel (%p417) target = $region24
        $region23: #{tpu_custom_call.1} parent=11 // pred_region
          _
        $region24: #{tpu_custom_call.1} parent=11 // pred_fallthru
          _
        // Predicated region
        $region25: #{tpu_custom_call.1} parent=11 // pred_check
          %p420 = pneg %p168
        $region26: #{tpu_custom_call.1} parent=11 // pred_check_branch
          %422 = sbr.rel (%p420) target = $region28
        $region27: #{tpu_custom_call.1} parent=11 // pred_region
          _
        $region28: #{tpu_custom_call.1} parent=11 // pred_fallthru
          _
        // Predicated region
        $region29: #{tpu_custom_call.1} parent=11 // pred_check
          %p423 = pneg %p189
        $region30: #{tpu_custom_call.1} parent=11 // pred_check_branch
          %425 = sbr.rel (%p423) target = $region32
        $region31: #{tpu_custom_call.1} parent=11 // pred_region
          _
        $region32: #{tpu_custom_call.1} parent=11 // pred_fallthru
          _
        // Predicated region
        $region33: #{tpu_custom_call.1} parent=11 // pred_check
          %p426 = pneg %p210
        $region34: #{tpu_custom_call.1} parent=11 // pred_check_branch
          %428 = sbr.rel (%p426) target = $region36
        $region35: #{tpu_custom_call.1} parent=11 // pred_region
          _
        $region36: #{tpu_custom_call.1} parent=11 // pred_fallthru
          _
        // Predicated region
        $region37: #{tpu_custom_call.1} parent=11 // pred_check
          %p429 = pneg %p231
        $region38: #{tpu_custom_call.1} parent=11 // pred_check_branch
          %431 = sbr.rel (%p429) target = $region40
        $region39: #{tpu_custom_call.1} parent=11 // pred_region
          _
        $region40: #{tpu_custom_call.1} parent=11 // pred_fallthru
          _
        // Predicated region
        $region41: #{tpu_custom_call.1} parent=11 // pred_check
          %p432 = pneg %p252
        $region42: #{tpu_custom_call.1} parent=11 // pred_check_branch
          %434 = sbr.rel (%p432) target = $region44
        $region43: #{tpu_custom_call.1} parent=11 // pred_region
          _
        $region44: #{tpu_custom_call.1} parent=11 // pred_fallthru
          _
        // Predicated region
        $region45: #{tpu_custom_call.1} parent=11 // pred_check
          %p435 = pneg %p273
        $region46: #{tpu_custom_call.1} parent=11 // pred_check_branch
          %437 = sbr.rel (%p435) target = $region48
        $region47: #{tpu_custom_call.1} parent=11 // pred_region
          _
        $region48: #{tpu_custom_call.1} parent=11 // pred_fallthru
          _
        // Predicated region
        $region49: #{tpu_custom_call.1} parent=11 // pred_check
          %p438 = pneg %p294
        $region50: #{tpu_custom_call.1} parent=11 // pred_check_branch
          %440 = sbr.rel (%p438) target = $region52
        $region51: #{tpu_custom_call.1} parent=11 // pred_region
          _
        $region52: #{tpu_custom_call.1} parent=11 // pred_fallthru
          _
        // Predicated region
        $region53: #{tpu_custom_call.1} parent=11 // pred_check
          %p441 = pneg %p315
        $region54: #{tpu_custom_call.1} parent=11 // pred_check_branch
          %443 = sbr.rel (%p441) target = $region56
        $region55: #{tpu_custom_call.1} parent=11 // pred_region
          _
        $region56: #{tpu_custom_call.1} parent=11 // pred_fallthru
          _
        // Predicated region
        $region57: #{tpu_custom_call.1} parent=11 // pred_check
          %p444 = pneg %p336
        $region58: #{tpu_custom_call.1} parent=11 // pred_check_branch
          %446 = sbr.rel (%p444) target = $region60
        $region59: #{tpu_custom_call.1} parent=11 // pred_region
          _
        $region60: #{tpu_custom_call.1} parent=11 // pred_fallthru
          _
      $region12: #{tpu_custom_call.1} parent=5 // pred_fallthru
        _
      %p447 = scmp.lt.s32.totalorder %s32, 2
      // Predicated region
      $region61: #{tpu_custom_call.1} parent=5 // pred_check
        %p448 = pneg %p447
      $region62: #{tpu_custom_call.1} parent=5 // pred_check_branch
        %450 = sbr.rel (%p448) target = $region64
      $region63: #{tpu_custom_call.1} parent=5 // pred_region
        // Predicated region
        $region65: #{tpu_custom_call.1} parent=63 // pred_check
          %p451 = pneg %p52
        $region66: #{tpu_custom_call.1} parent=63 // pred_check_branch
          %453 = sbr.rel (%p451) target = $region68
        $region67: #{tpu_custom_call.1} parent=63 // pred_region
          %s454 = sand.u32 %s42, 1
          %s455 = scalar_lea.sflag [#allocation3], %s454
          %s456 = sand.u32 %s42, 1
          %s457 = smul.addr %s456, 8
          %s458 = scalar_lea.vmem [#allocation2], %s457
          %s460 = ssub.s32 128, 128
          %461 = vsyncadd %s455, %s460
          %s462 = smul.addr %s32, 128
          %s463 = scalar_lea.hbm %s0, %s462
          %s465 = sshll.u32 %s458, 4
          %s466 = int_to_ptr.vmem [resolvable:$true] %s465
          %468 = dma.hbm_to_vmem [thread:$0]  %s463, 128, %s466, %s455
        $region68: #{tpu_custom_call.1} parent=63 // pred_fallthru
          _
        // Predicated region
        $region69: #{tpu_custom_call.1} parent=63 // pred_check
          %p469 = pneg %p78
        $region70: #{tpu_custom_call.1} parent=63 // pred_check_branch
          %471 = sbr.rel (%p469) target = $region72
        $region71: #{tpu_custom_call.1} parent=63 // pred_region
          %p472 = scmp.lt.s32.totalorder %s32, 1
          %s473 = scalar_select %p472, %s32, 1
          %s474 = smul.addr %s473, 2
          %s475 = smul.addr %s474, 8
          %s476 = scalar_lea.vmem %s1, %s475
        $region72: #{tpu_custom_call.1} parent=63 // pred_fallthru
          _
      $region64: #{tpu_custom_call.1} parent=5 // pred_fallthru
        _
      %p477 = scmp.le.s32.totalorder 1, %s32
      %p478 = scmp.lt.s32.totalorder %s32, 3
      %p479 = pnand %p477, %p478
      %p480 = pneg %p479
      // Predicated region
      $region73: #{tpu_custom_call.1} parent=5 // pred_check
        _
      $region74: #{tpu_custom_call.1} parent=5 // pred_check_branch
        %482 = sbr.rel (%p479) target = $region76
      $region75: #{tpu_custom_call.1} parent=5 // pred_region
        %s483 = ssub.s32 %s32, 1
        %s484 = sand.u32 %s45, 1
        %s485 = scalar_lea.sflag [#allocation3], %s484
        %s486 = sand.u32 %s45, 1
        %s487 = smul.addr %s486, 8
        %s488 = scalar_lea.vmem [#allocation2], %s487
        // Predicated region
        $region77: #{tpu_custom_call.1} parent=75 // pred_check
          %p489 = pneg %p58
        $region78: #{tpu_custom_call.1} parent=75 // pred_check_branch
          %491 = sbr.rel (%p489) target = $region80
        $region79: #{tpu_custom_call.1} parent=75 // pred_region
          %492 = dma.done %s485, 128
        $region80: #{tpu_custom_call.1} parent=75 // pred_fallthru
          _
        // Predicated region
        $region81: #{tpu_custom_call.1} parent=75 // pred_check
          %p493 = pneg %p105
        $region82: #{tpu_custom_call.1} parent=75 // pred_check_branch
          %495 = sbr.rel (%p493) target = $region84
        $region83: #{tpu_custom_call.1} parent=75 // pred_region
          %496 = dma.done [#allocation6], 128
        $region84: #{tpu_custom_call.1} parent=75 // pred_fallthru
          _
        %s497 = sand.u32 %s45, 1
        %s498 = scalar_lea.sflag [#allocation3], %s497
        %s499 = sand.u32 %s45, 1
        %s500 = smul.addr %s499, 8
        %s501 = scalar_lea.vmem [#allocation2], %s500
        %p502 = pneg %p58
        %p503 = pneg %p55
        %p504 = scmp.lt.s32.totalorder %s37, 1
        %s505 = scalar_select %p504, %s37, 1
        %s506 = smul.addr %s505, 2
        %s507 = smul.addr %s506, 8
        %s508 = scalar_lea.vmem %s1, %s507
        %p509 = pneg %p84
        %p510 = pneg %p81
        %p511 = pneg %p105
        %p512 = pneg %p102
        %p513 = pneg %p126
        %p514 = pneg %p123
        %p515 = pneg %p147
        %p516 = pneg %p144
        %p517 = pneg %p168
        %p518 = pneg %p165
        %p519 = pneg %p189
        %p520 = pneg %p186
        %p521 = pneg %p210
        %p522 = pneg %p207
        %p523 = pneg %p231
        %p524 = pneg %p228
        %p525 = pneg %p252
        %p526 = pneg %p249
        %p527 = pneg %p273
        %p528 = pneg %p270
        %p529 = pneg %p294
        %p530 = pneg %p291
        %p531 = pneg %p315
        %p532 = pneg %p312
        %p533 = pneg %p336
        %p534 = pneg %p333
        %p535 = pneg %p362
        %p536 = pneg %p359
        %s537 = sand.u32 %s349, 1
        %s538 = scalar_lea.sflag [#allocation4], %s537
        %s539 = sand.u32 %s349, 1
        %s540 = smul.addr %s539, 8
        %s541 = scalar_lea.vmem [#allocation7], %s540
        %p542 = pneg %p388
        %p543 = pneg %p385
        %s544 = sand.u32 %s375, 1
        %s545 = scalar_lea.sflag [#allocation9], %s544
        %s546 = sand.u32 %s375, 1
        %s547 = smul.addr %s546, 8
        %s548 = scalar_lea.vmem [#allocation8], %s547
        %p549 = scmp.lt.s32.totalorder %s37, 1
        %s550 = scalar_select %p549, %s37, 1
        %s551 = smul.addr %s550, 2
        %s552 = smul.addr %s551, 8
        %s553 = scalar_lea.vmem %s1, %s552
        %v554 = vld [vmem:[%s488] sm:$0xff]
        %v555 = vld [vmem:[%s553] sm:$0xff]
        %v556 = vld [vmem:[%s553 + $0x8] sm:$0xf]
        %v557 = vld [vmem:[#allocation5] sm:$0xff]
        %v558 = vld [vmem:[%s3] sm:$0xff]
        %v559 = vld [vmem:[%s3 + $0x8] sm:$0xff]
        %v560 = vld [vmem:[%s3 + $0x10] sm:$0xff]
        %v561 = vld [vmem:[%s3 + $0x18] sm:$0xff]
        %v562 = vld [vmem:[%s4] sm:$0xff]
        %v563 = vld [vmem:[%s4 + $0x8] sm:$0xff]
        %v564 = vld [vmem:[%s4 + $0x10] sm:$0xff]
        %v565 = vld [vmem:[%s4 + $0x18] sm:$0xff]
        %v566 = vld [vmem:[%s5] sm:$0xff]
        %v567 = vld [vmem:[%s5 + $0x8] sm:$0xff]
        %v568 = vld [vmem:[%s5 + $0x10] sm:$0xff]
        %v569 = vld [vmem:[%s5 + $0x18] sm:$0xff]
        %v570 = vld [vmem:[%s6] sm:$0xff]
        %v571 = vld [vmem:[%s6 + $0x8] sm:$0xff]
        %v572 = vld [vmem:[%s6 + $0x10] sm:$0xff]
        %v573 = vld [vmem:[%s6 + $0x18] sm:$0xff]
        %vm574 = vcmask 261120
        %v576 = vsel %vm574, %v554, 0
        %578 = vmatprep.subr.mxu0 0.0
        %579 = vmatpush1.msra.mxu0 %v558
        %580 = vmatprep.subr.mxu0 0.0
        %581 = vmatpush1.msra.mxu0 %v559
        %582 = vmatprep.subr.mxu0 0.0
        %583 = vmatpush1.msra.mxu0 %v560
        %584 = vmatprep.subr.mxu0 0.0
        %585 = vmatpush1.msra.mxu0 %v561
        %586 = vmatprep.subr.mxu0 0.0
        %587 = vmatpush1.msra.mxu0 0.0
        %588 = vmatprep.subr.mxu0 0.0
        %589 = vmatpush1.msra.mxu0 0.0
        %590 = vmatprep.subr.mxu0 0.0
        %591 = vmatpush1.msra.mxu0 0.0
        %592 = vmatprep.subr.mxu0 0.0
        %593 = vmatpush1.msra.mxu0 0.0
        %594 = vmatprep.subr.mxu0 0.0
        %595 = vmatpush1.msra.mxu0 0.0
        %596 = vmatprep.subr.mxu0 0.0
        %597 = vmatpush1.msra.mxu0 0.0
        %598 = vmatprep.subr.mxu0 0.0
        %599 = vmatpush1.msra.mxu0 0.0
        %600 = vmatprep.subr.mxu0 0.0
        %601 = vmatpush1.msra.mxu0 0.0
        %602 = vmatprep.subr.mxu0 0.0
        %603 = vmatpush1.msra.mxu0 0.0
        %604 = vmatprep.subr.mxu0 0.0
        %605 = vmatpush1.msra.mxu0 0.0
        %606 = vmatprep.subr.mxu0 0.0
        %607 = vmatpush1.msra.mxu0 0.0
        %608 = vmatprep.subr.mxu0 0.0
        %609 = vmatpush1.msra.mxu0 0.0
        %610 = vmatprep.subr.mxu0 0.0
        %611 = vmatpush1.msra.mxu0 0.0
        %612 = vmatprep.subr.mxu0 0.0
        %613 = vmatpush1.msra.mxu0 0.0
        %614 = vmatprep.subr.mxu0 0.0
        %615 = vmatpush1.msra.mxu0 0.0
        %616 = vmatprep.subr.mxu0 0.0
        %617 = vmatpush1.msra.mxu0 0.0
        %618 = vmatprep.subr.mxu0 0.0
        %619 = vmatpush1.msra.mxu0 0.0
        %620 = vmatprep.subr.mxu0 0.0
        %621 = vmatpush1.msra.mxu0 0.0
        %622 = vmatprep.subr.mxu0 0.0
        %623 = vmatpush1.msra.mxu0 0.0
        %624 = vmatprep.subr.mxu0 0.0
        %625 = vmatpush1.msra.mxu0 0.0
        %626 = vmatprep.subr.mxu0 0.0
        %627 = vmatpush1.msra.mxu0 0.0
        %628 = vmatprep.subr.mxu0 0.0
        %629 = vmatpush1.msra.mxu0 0.0
        %630 = vmatprep.subr.mxu0 0.0
        %631 = vmatpush1.msra.mxu0 0.0
        %632 = vmatprep.subr.mxu0 0.0
        %633 = vmatpush1.msra.mxu0 0.0
        %634 = vmatprep.subr.mxu0 0.0
        %635 = vmatpush1.msra.mxu0 0.0
        %636 = vmatprep.subr.mxu0 0.0
        %637 = vmatpush1.msra.mxu0 0.0
        %638 = vmatprep.subr.mxu0 0.0
        %639 = vmatpush1.msra.mxu0 0.0
        %640 = vmatprep.subr.mxu0 0.0
        %641 = vmatpush1.msra.mxu0 0.0
        %642 = vmatprep.mubr.f32.mxu0 0.0
        %643 = vmatmul.mubr.f32.gmra.mrb[0].mxu0 %v576
        %v644 = vpop.f32.mrb[0].mxu0
        %v645 = vadd.f32 0.0, %v644
        %v646 = vpop.f32.mrb[0].mxu0
        %647 = vdwg.mxu0
        %648 = vmatprep.subr.mxu0 0.0
        %649 = vmatpush1.msra.mxu0 %v562
        %650 = vmatprep.subr.mxu0 0.0
        %651 = vmatpush1.msra.mxu0 %v563
        %652 = vmatprep.subr.mxu0 0.0
        %653 = vmatpush1.msra.mxu0 %v564
        %654 = vmatprep.subr.mxu0 0.0
        %655 = vmatpush1.msra.mxu0 %v565
        %656 = vmatprep.subr.mxu0 0.0
        %657 = vmatpush1.msra.mxu0 0.0
        %658 = vmatprep.subr.mxu0 0.0
        %659 = vmatpush1.msra.mxu0 0.0
        %660 = vmatprep.subr.mxu0 0.0
        %661 = vmatpush1.msra.mxu0 0.0
        %662 = vmatprep.subr.mxu0 0.0
        %663 = vmatpush1.msra.mxu0 0.0
        %664 = vmatprep.subr.mxu0 0.0
        %665 = vmatpush1.msra.mxu0 0.0
        %666 = vmatprep.subr.mxu0 0.0
        %667 = vmatpush1.msra.mxu0 0.0
        %668 = vmatprep.subr.mxu0 0.0
        %669 = vmatpush1.msra.mxu0 0.0
        %670 = vmatprep.subr.mxu0 0.0
        %671 = vmatpush1.msra.mxu0 0.0
        %672 = vmatprep.subr.mxu0 0.0
        %673 = vmatpush1.msra.mxu0 0.0
        %674 = vmatprep.subr.mxu0 0.0
        %675 = vmatpush1.msra.mxu0 0.0
        %676 = vmatprep.subr.mxu0 0.0
        %677 = vmatpush1.msra.mxu0 0.0
        %678 = vmatprep.subr.mxu0 0.0
        %679 = vmatpush1.msra.mxu0 0.0
        %680 = vmatprep.subr.mxu0 0.0
        %681 = vmatpush1.msra.mxu0 0.0
        %682 = vmatprep.subr.mxu0 0.0
        %683 = vmatpush1.msra.mxu0 0.0
        %684 = vmatprep.subr.mxu0 0.0
        %685 = vmatpush1.msra.mxu0 0.0
        %686 = vmatprep.subr.mxu0 0.0
        %687 = vmatpush1.msra.mxu0 0.0
        %688 = vmatprep.subr.mxu0 0.0
        %689 = vmatpush1.msra.mxu0 0.0
        %690 = vmatprep.subr.mxu0 0.0
        %691 = vmatpush1.msra.mxu0 0.0
        %692 = vmatprep.subr.mxu0 0.0
        %693 = vmatpush1.msra.mxu0 0.0
        %694 = vmatprep.subr.mxu0 0.0
        %695 = vmatpush1.msra.mxu0 0.0
        %696 = vmatprep.subr.mxu0 0.0
        %697 = vmatpush1.msra.mxu0 0.0
        %698 = vmatprep.subr.mxu0 0.0
        %699 = vmatpush1.msra.mxu0 0.0
        %700 = vmatprep.subr.mxu0 0.0
        %701 = vmatpush1.msra.mxu0 0.0
        %702 = vmatprep.subr.mxu0 0.0
        %703 = vmatpush1.msra.mxu0 0.0
        %704 = vmatprep.subr.mxu0 0.0
        %705 = vmatpush1.msra.mxu0 0.0
        %706 = vmatprep.subr.mxu0 0.0
        %707 = vmatpush1.msra.mxu0 0.0
        %708 = vmatprep.subr.mxu0 0.0
        %709 = vmatpush1.msra.mxu0 0.0
        %710 = vmatprep.subr.mxu0 0.0
        %711 = vmatpush1.msra.mxu0 0.0
        %712 = vmatprep.mubr.f32.mxu0 0.0
        %713 = vmatmul.mubr.f32.gmra.mrb[0].mxu0 %v576
        %v714 = vpop.f32.mrb[0].mxu0
        %v715 = vadd.f32 0.0, %v714
        %v716 = vpop.f32.mrb[0].mxu0
        %717 = vdwg.mxu0
        %718 = vmatprep.subr.mxu0 0.0
        %719 = vmatpush1.msra.mxu0 %v566
        %720 = vmatprep.subr.mxu0 0.0
        %721 = vmatpush1.msra.mxu0 %v567
        %722 = vmatprep.subr.mxu0 0.0
        %723 = vmatpush1.msra.mxu0 %v568
        %724 = vmatprep.subr.mxu0 0.0
        %725 = vmatpush1.msra.mxu0 %v569
        %726 = vmatprep.subr.mxu0 0.0
        %727 = vmatpush1.msra.mxu0 0.0
        %728 = vmatprep.subr.mxu0 0.0
        %729 = vmatpush1.msra.mxu0 0.0
        %730 = vmatprep.subr.mxu0 0.0
        %731 = vmatpush1.msra.mxu0 0.0
        %732 = vmatprep.subr.mxu0 0.0
        %733 = vmatpush1.msra.mxu0 0.0
        %734 = vmatprep.subr.mxu0 0.0
        %735 = vmatpush1.msra.mxu0 0.0
        %736 = vmatprep.subr.mxu0 0.0
        %737 = vmatpush1.msra.mxu0 0.0
        %738 = vmatprep.subr.mxu0 0.0
        %739 = vmatpush1.msra.mxu0 0.0
        %740 = vmatprep.subr.mxu0 0.0
        %741 = vmatpush1.msra.mxu0 0.0
        %742 = vmatprep.subr.mxu0 0.0
        %743 = vmatpush1.msra.mxu0 0.0
        %744 = vmatprep.subr.mxu0 0.0
        %745 = vmatpush1.msra.mxu0 0.0
        %746 = vmatprep.subr.mxu0 0.0
        %747 = vmatpush1.msra.mxu0 0.0
        %748 = vmatprep.subr.mxu0 0.0
        %749 = vmatpush1.msra.mxu0 0.0
        %750 = vmatprep.subr.mxu0 0.0
        %751 = vmatpush1.msra.mxu0 0.0
        %752 = vmatprep.subr.mxu0 0.0
        %753 = vmatpush1.msra.mxu0 0.0
        %754 = vmatprep.subr.mxu0 0.0
        %755 = vmatpush1.msra.mxu0 0.0
        %756 = vmatprep.subr.mxu0 0.0
        %757 = vmatpush1.msra.mxu0 0.0
        %758 = vmatprep.subr.mxu0 0.0
        %759 = vmatpush1.msra.mxu0 0.0
        %760 = vmatprep.subr.mxu0 0.0
        %761 = vmatpush1.msra.mxu0 0.0
        %762 = vmatprep.subr.mxu0 0.0
        %763 = vmatpush1.msra.mxu0 0.0
        %764 = vmatprep.subr.mxu0 0.0
        %765 = vmatpush1.msra.mxu0 0.0
        %766 = vmatprep.subr.mxu0 0.0
        %767 = vmatpush1.msra.mxu0 0.0
        %768 = vmatprep.subr.mxu0 0.0
        %769 = vmatpush1.msra.mxu0 0.0
        %770 = vmatprep.subr.mxu0 0.0
        %771 = vmatpush1.msra.mxu0 0.0
        %772 = vmatprep.subr.mxu0 0.0
        %773 = vmatpush1.msra.mxu0 0.0
        %774 = vmatprep.subr.mxu0 0.0
        %775 = vmatpush1.msra.mxu0 0.0
        %776 = vmatprep.subr.mxu0 0.0
        %777 = vmatpush1.msra.mxu0 0.0
        %778 = vmatprep.subr.mxu0 0.0
        %779 = vmatpush1.msra.mxu0 0.0
        %780 = vmatprep.subr.mxu0 0.0
        %781 = vmatpush1.msra.mxu0 0.0
        %782 = vmatprep.mubr.f32.mxu0 0.0
        %783 = vmatmul.mubr.f32.gmra.mrb[0].mxu0 %v576
        %v784 = vpop.f32.mrb[0].mxu0
        %v785 = vadd.f32 0.0, %v784
        %v786 = vpop.f32.mrb[0].mxu0
        %787 = vdwg.mxu0
        %v789 = vsel %vm574, %v645, 0
        %v792 = vsel %vm574, %v715, 0
        %794 = vmatprep.subr.mxu0 0.0
        %795 = vmatpush1.xpose.msra.mxu0 %v792
        %796 = vmatprep.subr.mxu0 0.0
        %797 = vmatpush1.xpose.msra.mxu0 0.0
        %798 = vmatprep.subr.mxu0 0.0
        %799 = vmatpush1.xpose.msra.mxu0 0.0
        %800 = vmatprep.subr.mxu0 0.0
        %801 = vmatpush1.xpose.msra.mxu0 0.0
        %802 = vmatprep.subr.mxu0 0.0
        %803 = vmatpush1.xpose.msra.mxu0 0.0
        %804 = vmatprep.subr.mxu0 0.0
        %805 = vmatpush1.xpose.msra.mxu0 0.0
        %806 = vmatprep.subr.mxu0 0.0
        %807 = vmatpush1.xpose.msra.mxu0 0.0
        %808 = vmatprep.subr.mxu0 0.0
        %809 = vmatpush1.xpose.msra.mxu0 0.0
        %810 = vmatprep.subr.mxu0 0.0
        %811 = vmatpush1.xpose.msra.mxu0 0.0
        %812 = vmatprep.subr.mxu0 0.0
        %813 = vmatpush1.xpose.msra.mxu0 0.0
        %814 = vmatprep.subr.mxu0 0.0
        %815 = vmatpush1.xpose.msra.mxu0 0.0
        %816 = vmatprep.subr.mxu0 0.0
        %817 = vmatpush1.xpose.msra.mxu0 0.0
        %818 = vmatprep.subr.mxu0 0.0
        %819 = vmatpush1.xpose.msra.mxu0 0.0
        %820 = vmatprep.subr.mxu0 0.0
        %821 = vmatpush1.xpose.msra.mxu0 0.0
        %822 = vmatprep.subr.mxu0 0.0
        %823 = vmatpush1.xpose.msra.mxu0 0.0
        %824 = vmatprep.subr.mxu0 0.0
        %825 = vmatpush1.xpose.msra.mxu0 0.0
        %826 = vmatprep.subr.mxu0 0.0
        %827 = vmatpush1.xpose.msra.mxu0 0.0
        %828 = vmatprep.subr.mxu0 0.0
        %829 = vmatpush1.xpose.msra.mxu0 0.0
        %830 = vmatprep.subr.mxu0 0.0
        %831 = vmatpush1.xpose.msra.mxu0 0.0
        %832 = vmatprep.subr.mxu0 0.0
        %833 = vmatpush1.xpose.msra.mxu0 0.0
        %834 = vmatprep.subr.mxu0 0.0
        %835 = vmatpush1.xpose.msra.mxu0 0.0
        %836 = vmatprep.subr.mxu0 0.0
        %837 = vmatpush1.xpose.msra.mxu0 0.0
        %838 = vmatprep.subr.mxu0 0.0
        %839 = vmatpush1.xpose.msra.mxu0 0.0
        %840 = vmatprep.subr.mxu0 0.0
        %841 = vmatpush1.xpose.msra.mxu0 0.0
        %842 = vmatprep.subr.mxu0 0.0
        %843 = vmatpush1.xpose.msra.mxu0 0.0
        %844 = vmatprep.subr.mxu0 0.0
        %845 = vmatpush1.xpose.msra.mxu0 0.0
        %846 = vmatprep.subr.mxu0 0.0
        %847 = vmatpush1.xpose.msra.mxu0 0.0
        %848 = vmatprep.subr.mxu0 0.0
        %849 = vmatpush1.xpose.msra.mxu0 0.0
        %850 = vmatprep.subr.mxu0 0.0
        %851 = vmatpush1.xpose.msra.mxu0 0.0
        %852 = vmatprep.subr.mxu0 0.0
        %853 = vmatpush1.xpose.msra.mxu0 0.0
        %854 = vmatprep.subr.mxu0 0.0
        %855 = vmatpush1.xpose.msra.mxu0 0.0
        %856 = vmatprep.subr.mxu0 0.0
        %857 = vmatpush1.xpose.msra.mxu0 0.0
        %858 = vmatprep.mubr.f32.mxu0 0.0
        %859 = vmatmul.mubr.f32.gmra.mrb[0].mxu0 %v789
        %v860 = vpop.f32.mrb[0].mxu0
        %v861 = vadd.f32 0.0, %v860
        %v862 = vpop.f32.mrb[0].mxu0
        %863 = vdwg.mxu0
        %v864 = vmul.f32 %v861, 0.17677669
        %vm865 = vcmask 64512
        %v866 = vsel %vm865, %v864, -inf
        %867 = vmax.xlane.f32.xlu0 %v866
        %v868 = vpop.xlane.xlu0 %867
        %v869 = vsub.f32 %v864, %v868
        %v870 = vmul.f32 %v869, 1.442695
        %v871 = vpow.pop %v870
        %v872 = vsel %vm865, %v871, 0.0
        %873 = vadd.xlane.f32.xlu0 %v872
        %v874 = vpop.xlane.xlu0 %873
        %v875 = vrcp.pop %v874
        %v876 = vmul.f32 %v871, %v875
        %v878 = vsel %vm865, %v876, 0
        %880 = vmatprep.subr.mxu0 0.0
        %881 = vmatpush1.msra.mxu0 %v785
        %882 = vmatprep.subr.mxu0 0.0
        %883 = vmatpush1.msra.mxu0 0.0
        %884 = vmatprep.subr.mxu0 0.0
        %885 = vmatpush1.msra.mxu0 0.0
        %886 = vmatprep.subr.mxu0 0.0
        %887 = vmatpush1.msra.mxu0 0.0
        %888 = vmatprep.subr.mxu0 0.0
        %889 = vmatpush1.msra.mxu0 0.0
        %890 = vmatprep.subr.mxu0 0.0
        %891 = vmatpush1.msra.mxu0 0.0
        %892 = vmatprep.subr.mxu0 0.0
        %893 = vmatpush1.msra.mxu0 0.0
        %894 = vmatprep.subr.mxu0 0.0
        %895 = vmatpush1.msra.mxu0 0.0
        %896 = vmatprep.subr.mxu0 0.0
        %897 = vmatpush1.msra.mxu0 0.0
        %898 = vmatprep.subr.mxu0 0.0
        %899 = vmatpush1.msra.mxu0 0.0
        %900 = vmatprep.subr.mxu0 0.0
        %901 = vmatpush1.msra.mxu0 0.0
        %902 = vmatprep.subr.mxu0 0.0
        %903 = vmatpush1.msra.mxu0 0.0
        %904 = vmatprep.subr.mxu0 0.0
        %905 = vmatpush1.msra.mxu0 0.0
        %906 = vmatprep.subr.mxu0 0.0
        %907 = vmatpush1.msra.mxu0 0.0
        %908 = vmatprep.subr.mxu0 0.0
        %909 = vmatpush1.msra.mxu0 0.0
        %910 = vmatprep.subr.mxu0 0.0
        %911 = vmatpush1.msra.mxu0 0.0
        %912 = vmatprep.subr.mxu0 0.0
        %913 = vmatpush1.msra.mxu0 0.0
        %914 = vmatprep.subr.mxu0 0.0
        %915 = vmatpush1.msra.mxu0 0.0
        %916 = vmatprep.subr.mxu0 0.0
        %917 = vmatpush1.msra.mxu0 0.0
        %918 = vmatprep.subr.mxu0 0.0
        %919 = vmatpush1.msra.mxu0 0.0
        %920 = vmatprep.subr.mxu0 0.0
        %921 = vmatpush1.msra.mxu0 0.0
        %922 = vmatprep.subr.mxu0 0.0
        %923 = vmatpush1.msra.mxu0 0.0
        %924 = vmatprep.subr.mxu0 0.0
        %925 = vmatpush1.msra.mxu0 0.0
        %926 = vmatprep.subr.mxu0 0.0
        %927 = vmatpush1.msra.mxu0 0.0
        %928 = vmatprep.subr.mxu0 0.0
        %929 = vmatpush1.msra.mxu0 0.0
        %930 = vmatprep.subr.mxu0 0.0
        %931 = vmatpush1.msra.mxu0 0.0
        %932 = vmatprep.subr.mxu0 0.0
        %933 = vmatpush1.msra.mxu0 0.0
        %934 = vmatprep.subr.mxu0 0.0
        %935 = vmatpush1.msra.mxu0 0.0
        %936 = vmatprep.subr.mxu0 0.0
        %937 = vmatpush1.msra.mxu0 0.0
        %938 = vmatprep.subr.mxu0 0.0
        %939 = vmatpush1.msra.mxu0 0.0
        %940 = vmatprep.subr.mxu0 0.0
        %941 = vmatpush1.msra.mxu0 0.0
        %942 = vmatprep.subr.mxu0 0.0
        %943 = vmatpush1.msra.mxu0 0.0
        %944 = vmatprep.mubr.f32.mxu0 0.0
        %945 = vmatmul.mubr.f32.gmra.mrb[0].mxu0 %v878
        %v946 = vpop.f32.mrb[0].mxu0
        %v947 = vadd.f32 0.0, %v946
        %v948 = vpop.f32.mrb[0].mxu0
        %949 = vdwg.mxu0
        %v951 = vsel %vm574, %v947, 0
        %953 = vmatprep.subr.mxu0 0.0
        %954 = vmatpush1.msra.mxu0 %v570
        %955 = vmatprep.subr.mxu0 0.0
        %956 = vmatpush1.msra.mxu0 %v571
        %957 = vmatprep.subr.mxu0 0.0
        %958 = vmatpush1.msra.mxu0 %v572
        %959 = vmatprep.subr.mxu0 0.0
        %960 = vmatpush1.msra.mxu0 %v573
        %961 = vmatprep.subr.mxu0 0.0
        %962 = vmatpush1.msra.mxu0 0.0
        %963 = vmatprep.subr.mxu0 0.0
        %964 = vmatpush1.msra.mxu0 0.0
        %965 = vmatprep.subr.mxu0 0.0
        %966 = vmatpush1.msra.mxu0 0.0
        %967 = vmatprep.subr.mxu0 0.0
        %968 = vmatpush1.msra.mxu0 0.0
        %969 = vmatprep.subr.mxu0 0.0
        %970 = vmatpush1.msra.mxu0 0.0
        %971 = vmatprep.subr.mxu0 0.0
        %972 = vmatpush1.msra.mxu0 0.0
        %973 = vmatprep.subr.mxu0 0.0
        %974 = vmatpush1.msra.mxu0 0.0
        %975 = vmatprep.subr.mxu0 0.0
        %976 = vmatpush1.msra.mxu0 0.0
        %977 = vmatprep.subr.mxu0 0.0
        %978 = vmatpush1.msra.mxu0 0.0
        %979 = vmatprep.subr.mxu0 0.0
        %980 = vmatpush1.msra.mxu0 0.0
        %981 = vmatprep.subr.mxu0 0.0
        %982 = vmatpush1.msra.mxu0 0.0
        %983 = vmatprep.subr.mxu0 0.0
        %984 = vmatpush1.msra.mxu0 0.0
        %985 = vmatprep.subr.mxu0 0.0
        %986 = vmatpush1.msra.mxu0 0.0
        %987 = vmatprep.subr.mxu0 0.0
        %988 = vmatpush1.msra.mxu0 0.0
        %989 = vmatprep.subr.mxu0 0.0
        %990 = vmatpush1.msra.mxu0 0.0
        %991 = vmatprep.subr.mxu0 0.0
        %992 = vmatpush1.msra.mxu0 0.0
        %993 = vmatprep.subr.mxu0 0.0
        %994 = vmatpush1.msra.mxu0 0.0
        %995 = vmatprep.subr.mxu0 0.0
        %996 = vmatpush1.msra.mxu0 0.0
        %997 = vmatprep.subr.mxu0 0.0
        %998 = vmatpush1.msra.mxu0 0.0
        %999 = vmatprep.subr.mxu0 0.0
        %1000 = vmatpush1.msra.mxu0 0.0
        %1001 = vmatprep.subr.mxu0 0.0
        %1002 = vmatpush1.msra.mxu0 0.0
        %1003 = vmatprep.subr.mxu0 0.0
        %1004 = vmatpush1.msra.mxu0 0.0
        %1005 = vmatprep.subr.mxu0 0.0
        %1006 = vmatpush1.msra.mxu0 0.0
        %1007 = vmatprep.subr.mxu0 0.0
        %1008 = vmatpush1.msra.mxu0 0.0
        %1009 = vmatprep.subr.mxu0 0.0
        %1010 = vmatpush1.msra.mxu0 0.0
        %1011 = vmatprep.subr.mxu0 0.0
        %1012 = vmatpush1.msra.mxu0 0.0
        %1013 = vmatprep.subr.mxu0 0.0
        %1014 = vmatpush1.msra.mxu0 0.0
        %1015 = vmatprep.subr.mxu0 0.0
        %1016 = vmatpush1.msra.mxu0 0.0
        %1017 = vmatprep.mubr.f32.mxu0 0.0
        %1018 = vmatmul.mubr.f32.gmra.mrb[0].mxu0 %v951
        %v1019 = vpop.f32.mrb[0].mxu0
        %v1020 = vadd.f32 0.0, %v1019
        %v1021 = vpop.f32.mrb[0].mxu0
        %1022 = vdwg.mxu0
        %v1023 = vadd.f32 %v554, %v1020
        %v1025 = vsel %vm865, %v557, 0
        %1027 = vmatprep.subr.mxu0 0.0
        %1028 = vmatpush1.msra.mxu0 %v1023
        %1029 = vmatprep.subr.mxu0 0.0
        %1030 = vmatpush1.msra.mxu0 0.0
        %1031 = vmatprep.subr.mxu0 0.0
        %1032 = vmatpush1.msra.mxu0 0.0
        %1033 = vmatprep.subr.mxu0 0.0
        %1034 = vmatpush1.msra.mxu0 0.0
        %1035 = vmatprep.subr.mxu0 0.0
        %1036 = vmatpush1.msra.mxu0 0.0
        %1037 = vmatprep.subr.mxu0 0.0
        %1038 = vmatpush1.msra.mxu0 0.0
        %1039 = vmatprep.subr.mxu0 0.0
        %1040 = vmatpush1.msra.mxu0 0.0
        %1041 = vmatprep.subr.mxu0 0.0
        %1042 = vmatpush1.msra.mxu0 0.0
        %1043 = vmatprep.subr.mxu0 0.0
        %1044 = vmatpush1.msra.mxu0 0.0
        %1045 = vmatprep.subr.mxu0 0.0
        %1046 = vmatpush1.msra.mxu0 0.0
        %1047 = vmatprep.subr.mxu0 0.0
        %1048 = vmatpush1.msra.mxu0 0.0
        %1049 = vmatprep.subr.mxu0 0.0
        %1050 = vmatpush1.msra.mxu0 0.0
        %1051 = vmatprep.subr.mxu0 0.0
        %1052 = vmatpush1.msra.mxu0 0.0
        %1053 = vmatprep.subr.mxu0 0.0
        %1054 = vmatpush1.msra.mxu0 0.0
        %1055 = vmatprep.subr.mxu0 0.0
        %1056 = vmatpush1.msra.mxu0 0.0
        %1057 = vmatprep.subr.mxu0 0.0
        %1058 = vmatpush1.msra.mxu0 0.0
        %1059 = vmatprep.subr.mxu0 0.0
        %1060 = vmatpush1.msra.mxu0 0.0
        %1061 = vmatprep.subr.mxu0 0.0
        %1062 = vmatpush1.msra.mxu0 0.0
        %1063 = vmatprep.subr.mxu0 0.0
        %1064 = vmatpush1.msra.mxu0 0.0
        %1065 = vmatprep.subr.mxu0 0.0
        %1066 = vmatpush1.msra.mxu0 0.0
        %1067 = vmatprep.subr.mxu0 0.0
        %1068 = vmatpush1.msra.mxu0 0.0
        %1069 = vmatprep.subr.mxu0 0.0
        %1070 = vmatpush1.msra.mxu0 0.0
        %1071 = vmatprep.subr.mxu0 0.0
        %1072 = vmatpush1.msra.mxu0 0.0
        %1073 = vmatprep.subr.mxu0 0.0
        %1074 = vmatpush1.msra.mxu0 0.0
        %1075 = vmatprep.subr.mxu0 0.0
        %1076 = vmatpush1.msra.mxu0 0.0
        %1077 = vmatprep.subr.mxu0 0.0
        %1078 = vmatpush1.msra.mxu0 0.0
        %1079 = vmatprep.subr.mxu0 0.0
        %1080 = vmatpush1.msra.mxu0 0.0
        %1081 = vmatprep.subr.mxu0 0.0
        %1082 = vmatpush1.msra.mxu0 0.0
        %1083 = vmatprep.subr.mxu0 0.0
        %1084 = vmatpush1.msra.mxu0 0.0
        %1085 = vmatprep.subr.mxu0 0.0
        %1086 = vmatpush1.msra.mxu0 0.0
        %1087 = vmatprep.subr.mxu0 0.0
        %1088 = vmatpush1.msra.mxu0 0.0
        %1089 = vmatprep.subr.mxu0 0.0
        %1090 = vmatpush1.msra.mxu0 0.0
        %1091 = vmatprep.mubr.f32.mxu0 0.0
        %1092 = vmatmul.mubr.f32.gmra.mrb[0].mxu0 %v1025
        %v1093 = vpop.f32.mrb[0].mxu0
        %v1094 = vadd.f32 0.0, %v1093
        %v1095 = vpop.f32.mrb[0].mxu0
        %1096 = vdwg.mxu0
        %v1097 = vsub.f32 %v1023, %v1094
        %v1098 = vld [vmem:[%s7] sm:$0xff]
        %v1099 = vld [vmem:[%s7 + $0x8] sm:$0xff]
        %v1100 = vld [vmem:[%s7 + $0x10] sm:$0xff]
        %v1101 = vld [vmem:[%s7 + $0x18] sm:$0xff]
        %v1102 = vld [vmem:[%s8] sm:$0xff]
        %v1103 = vld [vmem:[%s8 + $0x8] sm:$0xff]
        %v1104 = vld [vmem:[%s8 + $0x10] sm:$0xff]
        %v1105 = vld [vmem:[%s8 + $0x18] sm:$0xff]
        %v1106 = vld [vmem:[%s9] sm:$0xff]
        %v1107 = vld [vmem:[%s9 + $0x8] sm:$0xff]
        %v1108 = vld [vmem:[%s9 + $0x10] sm:$0xff]
        %v1109 = vld [vmem:[%s9 + $0x18] sm:$0xff]
        %v1110 = vld [vmem:[%s10] sm:$0xff]
        %v1111 = vld [vmem:[%s10 + $0x8] sm:$0xff]
        %v1112 = vld [vmem:[%s10 + $0x10] sm:$0xff]
        %v1113 = vld [vmem:[%s10 + $0x18] sm:$0xff]
        %v1115 = vsel %vm574, %v1097, 0
        %1117 = vmatprep.subr.mxu0 0.0
        %1118 = vmatpush1.msra.mxu0 %v1098
        %1119 = vmatprep.subr.mxu0 0.0
        %1120 = vmatpush1.msra.mxu0 %v1099
        %1121 = vmatprep.subr.mxu0 0.0
        %1122 = vmatpush1.msra.mxu0 %v1100
        %1123 = vmatprep.subr.mxu0 0.0
        %1124 = vmatpush1.msra.mxu0 %v1101
        %1125 = vmatprep.subr.mxu0 0.0
        %1126 = vmatpush1.msra.mxu0 0.0
        %1127 = vmatprep.subr.mxu0 0.0
        %1128 = vmatpush1.msra.mxu0 0.0
        %1129 = vmatprep.subr.mxu0 0.0
        %1130 = vmatpush1.msra.mxu0 0.0
        %1131 = vmatprep.subr.mxu0 0.0
        %1132 = vmatpush1.msra.mxu0 0.0
        %1133 = vmatprep.subr.mxu0 0.0
        %1134 = vmatpush1.msra.mxu0 0.0
        %1135 = vmatprep.subr.mxu0 0.0
        %1136 = vmatpush1.msra.mxu0 0.0
        %1137 = vmatprep.subr.mxu0 0.0
        %1138 = vmatpush1.msra.mxu0 0.0
        %1139 = vmatprep.subr.mxu0 0.0
        %1140 = vmatpush1.msra.mxu0 0.0
        %1141 = vmatprep.subr.mxu0 0.0
        %1142 = vmatpush1.msra.mxu0 0.0
        %1143 = vmatprep.subr.mxu0 0.0
        %1144 = vmatpush1.msra.mxu0 0.0
        %1145 = vmatprep.subr.mxu0 0.0
        %1146 = vmatpush1.msra.mxu0 0.0
        %1147 = vmatprep.subr.mxu0 0.0
        %1148 = vmatpush1.msra.mxu0 0.0
        %1149 = vmatprep.subr.mxu0 0.0
        %1150 = vmatpush1.msra.mxu0 0.0
        %1151 = vmatprep.subr.mxu0 0.0
        %1152 = vmatpush1.msra.mxu0 0.0
        %1153 = vmatprep.subr.mxu0 0.0
        %1154 = vmatpush1.msra.mxu0 0.0
        %1155 = vmatprep.subr.mxu0 0.0
        %1156 = vmatpush1.msra.mxu0 0.0
        %1157 = vmatprep.subr.mxu0 0.0
        %1158 = vmatpush1.msra.mxu0 0.0
        %1159 = vmatprep.subr.mxu0 0.0
        %1160 = vmatpush1.msra.mxu0 0.0
        %1161 = vmatprep.subr.mxu0 0.0
        %1162 = vmatpush1.msra.mxu0 0.0
        %1163 = vmatprep.subr.mxu0 0.0
        %1164 = vmatpush1.msra.mxu0 0.0
        %1165 = vmatprep.subr.mxu0 0.0
        %1166 = vmatpush1.msra.mxu0 0.0
        %1167 = vmatprep.subr.mxu0 0.0
        %1168 = vmatpush1.msra.mxu0 0.0
        %1169 = vmatprep.subr.mxu0 0.0
        %1170 = vmatpush1.msra.mxu0 0.0
        %1171 = vmatprep.subr.mxu0 0.0
        %1172 = vmatpush1.msra.mxu0 0.0
        %1173 = vmatprep.subr.mxu0 0.0
        %1174 = vmatpush1.msra.mxu0 0.0
        %1175 = vmatprep.subr.mxu0 0.0
        %1176 = vmatpush1.msra.mxu0 0.0
        %1177 = vmatprep.subr.mxu0 0.0
        %1178 = vmatpush1.msra.mxu0 0.0
        %1179 = vmatprep.subr.mxu0 0.0
        %1180 = vmatpush1.msra.mxu0 0.0
        %1181 = vmatprep.mubr.f32.mxu0 0.0
        %1182 = vmatmul.mubr.f32.gmra.mrb[0].mxu0 %v1115
        %v1183 = vpop.f32.mrb[0].mxu0
        %v1184 = vadd.f32 0.0, %v1183
        %v1185 = vpop.f32.mrb[0].mxu0
        %1186 = vdwg.mxu0
        %v1188 = vsel %vm574, %v555, 0
        %v1191 = vsel %vm574, %v556, 0
        %1193 = vmatprep.subr.mxu0 0.0
        %1194 = vmatpush1.msra.mxu0 %v1102
        %1195 = vmatprep.subr.mxu0 0.0
        %1196 = vmatpush1.msra.mxu0 %v1103
        %1197 = vmatprep.subr.mxu0 0.0
        %1198 = vmatpush1.msra.mxu0 %v1104
        %1199 = vmatprep.subr.mxu0 0.0
        %1200 = vmatpush1.msra.mxu0 %v1105
        %1201 = vmatprep.subr.mxu0 0.0
        %1202 = vmatpush1.msra.mxu0 0.0
        %1203 = vmatprep.subr.mxu0 0.0
        %1204 = vmatpush1.msra.mxu0 0.0
        %1205 = vmatprep.subr.mxu0 0.0
        %1206 = vmatpush1.msra.mxu0 0.0
        %1207 = vmatprep.subr.mxu0 0.0
        %1208 = vmatpush1.msra.mxu0 0.0
        %1209 = vmatprep.subr.mxu0 0.0
        %1210 = vmatpush1.msra.mxu0 0.0
        %1211 = vmatprep.subr.mxu0 0.0
        %1212 = vmatpush1.msra.mxu0 0.0
        %1213 = vmatprep.subr.mxu0 0.0
        %1214 = vmatpush1.msra.mxu0 0.0
        %1215 = vmatprep.subr.mxu0 0.0
        %1216 = vmatpush1.msra.mxu0 0.0
        %1217 = vmatprep.subr.mxu0 0.0
        %1218 = vmatpush1.msra.mxu0 0.0
        %1219 = vmatprep.subr.mxu0 0.0
        %1220 = vmatpush1.msra.mxu0 0.0
        %1221 = vmatprep.subr.mxu0 0.0
        %1222 = vmatpush1.msra.mxu0 0.0
        %1223 = vmatprep.subr.mxu0 0.0
        %1224 = vmatpush1.msra.mxu0 0.0
        %1225 = vmatprep.subr.mxu0 0.0
        %1226 = vmatpush1.msra.mxu0 0.0
        %1227 = vmatprep.subr.mxu0 0.0
        %1228 = vmatpush1.msra.mxu0 0.0
        %1229 = vmatprep.subr.mxu0 0.0
        %1230 = vmatpush1.msra.mxu0 0.0
        %1231 = vmatprep.subr.mxu0 0.0
        %1232 = vmatpush1.msra.mxu0 0.0
        %1233 = vmatprep.subr.mxu0 0.0
        %1234 = vmatpush1.msra.mxu0 0.0
        %1235 = vmatprep.subr.mxu0 0.0
        %1236 = vmatpush1.msra.mxu0 0.0
        %1237 = vmatprep.subr.mxu0 0.0
        %1238 = vmatpush1.msra.mxu0 0.0
        %1239 = vmatprep.subr.mxu0 0.0
        %1240 = vmatpush1.msra.mxu0 0.0
        %1241 = vmatprep.subr.mxu0 0.0
        %1242 = vmatpush1.msra.mxu0 0.0
        %1243 = vmatprep.subr.mxu0 0.0
        %1244 = vmatpush1.msra.mxu0 0.0
        %1245 = vmatprep.subr.mxu0 0.0
        %1246 = vmatpush1.msra.mxu0 0.0
        %1247 = vmatprep.subr.mxu0 0.0
        %1248 = vmatpush1.msra.mxu0 0.0
        %1249 = vmatprep.subr.mxu0 0.0
        %1250 = vmatpush1.msra.mxu0 0.0
        %1251 = vmatprep.subr.mxu0 0.0
        %1252 = vmatpush1.msra.mxu0 0.0
        %1253 = vmatprep.subr.mxu0 0.0
        %1254 = vmatpush1.msra.mxu0 0.0
        %1255 = vmatprep.subr.mxu0 0.0
        %1256 = vmatpush1.msra.mxu0 0.0
        %1257 = vmatprep.mubr.f32.mxu0 0.0
        %1258 = vmatmul.mubr.f32.gmra.mrb[0].mxu0 %v1188
        %v1259 = vpop.f32.mrb[0].mxu0
        %v1260 = vadd.f32 0.0, %v1259
        %v1261 = vpop.f32.mrb[0].mxu0
        %1262 = vmatprep.mubr.f32.mxu0 0.0
        %1263 = vmatmul.mubr.f32.gmra.mrb[0].mxu0 %v1191
        %v1264 = vpop.f32.mrb[0].mxu0
        %v1265 = vadd.f32 0.0, %v1264
        %v1266 = vpop.f32.mrb[0].mxu0
        %1267 = vdwg.mxu0
        %1268 = vmatprep.subr.mxu0 0.0
        %1269 = vmatpush1.msra.mxu0 %v1106
        %1270 = vmatprep.subr.mxu0 0.0
        %1271 = vmatpush1.msra.mxu0 %v1107
        %1272 = vmatprep.subr.mxu0 0.0
        %1273 = vmatpush1.msra.mxu0 %v1108
        %1274 = vmatprep.subr.mxu0 0.0
        %1275 = vmatpush1.msra.mxu0 %v1109
        %1276 = vmatprep.subr.mxu0 0.0
        %1277 = vmatpush1.msra.mxu0 0.0
        %1278 = vmatprep.subr.mxu0 0.0
        %1279 = vmatpush1.msra.mxu0 0.0
        %1280 = vmatprep.subr.mxu0 0.0
        %1281 = vmatpush1.msra.mxu0 0.0
        %1282 = vmatprep.subr.mxu0 0.0
        %1283 = vmatpush1.msra.mxu0 0.0
        %1284 = vmatprep.subr.mxu0 0.0
        %1285 = vmatpush1.msra.mxu0 0.0
        %1286 = vmatprep.subr.mxu0 0.0
        %1287 = vmatpush1.msra.mxu0 0.0
        %1288 = vmatprep.subr.mxu0 0.0
        %1289 = vmatpush1.msra.mxu0 0.0
        %1290 = vmatprep.subr.mxu0 0.0
        %1291 = vmatpush1.msra.mxu0 0.0
        %1292 = vmatprep.subr.mxu0 0.0
        %1293 = vmatpush1.msra.mxu0 0.0
        %1294 = vmatprep.subr.mxu0 0.0
        %1295 = vmatpush1.msra.mxu0 0.0
        %1296 = vmatprep.subr.mxu0 0.0
        %1297 = vmatpush1.msra.mxu0 0.0
        %1298 = vmatprep.subr.mxu0 0.0
        %1299 = vmatpush1.msra.mxu0 0.0
        %1300 = vmatprep.subr.mxu0 0.0
        %1301 = vmatpush1.msra.mxu0 0.0
        %1302 = vmatprep.subr.mxu0 0.0
        %1303 = vmatpush1.msra.mxu0 0.0
        %1304 = vmatprep.subr.mxu0 0.0
        %1305 = vmatpush1.msra.mxu0 0.0
        %1306 = vmatprep.subr.mxu0 0.0
        %1307 = vmatpush1.msra.mxu0 0.0
        %1308 = vmatprep.subr.mxu0 0.0
        %1309 = vmatpush1.msra.mxu0 0.0
        %1310 = vmatprep.subr.mxu0 0.0
        %1311 = vmatpush1.msra.mxu0 0.0
        %1312 = vmatprep.subr.mxu0 0.0
        %1313 = vmatpush1.msra.mxu0 0.0
        %1314 = vmatprep.subr.mxu0 0.0
        %1315 = vmatpush1.msra.mxu0 0.0
        %1316 = vmatprep.subr.mxu0 0.0
        %1317 = vmatpush1.msra.mxu0 0.0
        %1318 = vmatprep.subr.mxu0 0.0
        %1319 = vmatpush1.msra.mxu0 0.0
        %1320 = vmatprep.subr.mxu0 0.0
        %1321 = vmatpush1.msra.mxu0 0.0
        %1322 = vmatprep.subr.mxu0 0.0
        %1323 = vmatpush1.msra.mxu0 0.0
        %1324 = vmatprep.subr.mxu0 0.0
        %1325 = vmatpush1.msra.mxu0 0.0
        %1326 = vmatprep.subr.mxu0 0.0
        %1327 = vmatpush1.msra.mxu0 0.0
        %1328 = vmatprep.subr.mxu0 0.0
        %1329 = vmatpush1.msra.mxu0 0.0
        %1330 = vmatprep.subr.mxu0 0.0
        %1331 = vmatpush1.msra.mxu0 0.0
        %1332 = vmatprep.mubr.f32.mxu0 0.0
        %1333 = vmatmul.mubr.f32.gmra.mrb[0].mxu0 %v1188
        %v1334 = vpop.f32.mrb[0].mxu0
        %v1335 = vadd.f32 0.0, %v1334
        %v1336 = vpop.f32.mrb[0].mxu0
        %1337 = vmatprep.mubr.f32.mxu0 0.0
        %1338 = vmatmul.mubr.f32.gmra.mrb[0].mxu0 %v1191
        %v1339 = vpop.f32.mrb[0].mxu0
        %v1340 = vadd.f32 0.0, %v1339
        %v1341 = vpop.f32.mrb[0].mxu0
        %1342 = vdwg.mxu0
        %v1344 = vsel %vm574, %v1184, 0
        %v1347 = vsel %vm574, %v1260, 0
        %v1350 = vsel %vm574, %v1265, 0
        %1352 = vmatprep.subr.mxu0 0.0
        %1353 = vmatpush1.xpose.msra.mxu0 %v1347
        %1354 = vmatprep.subr.mxu0 0.0
        %1355 = vmatpush1.xpose.msra.mxu0 %v1350
        %1356 = vmatprep.subr.mxu0 0.0
        %1357 = vmatpush1.xpose.msra.mxu0 0.0
        %1358 = vmatprep.subr.mxu0 0.0
        %1359 = vmatpush1.xpose.msra.mxu0 0.0
        %1360 = vmatprep.subr.mxu0 0.0
        %1361 = vmatpush1.xpose.msra.mxu0 0.0
        %1362 = vmatprep.subr.mxu0 0.0
        %1363 = vmatpush1.xpose.msra.mxu0 0.0
        %1364 = vmatprep.subr.mxu0 0.0
        %1365 = vmatpush1.xpose.msra.mxu0 0.0
        %1366 = vmatprep.subr.mxu0 0.0
        %1367 = vmatpush1.xpose.msra.mxu0 0.0
        %1368 = vmatprep.subr.mxu0 0.0
        %1369 = vmatpush1.xpose.msra.mxu0 0.0
        %1370 = vmatprep.subr.mxu0 0.0
        %1371 = vmatpush1.xpose.msra.mxu0 0.0
        %1372 = vmatprep.subr.mxu0 0.0
        %1373 = vmatpush1.xpose.msra.mxu0 0.0
        %1374 = vmatprep.subr.mxu0 0.0
        %1375 = vmatpush1.xpose.msra.mxu0 0.0
        %1376 = vmatprep.subr.mxu0 0.0
        %1377 = vmatpush1.xpose.msra.mxu0 0.0
        %1378 = vmatprep.subr.mxu0 0.0
        %1379 = vmatpush1.xpose.msra.mxu0 0.0
        %1380 = vmatprep.subr.mxu0 0.0
        %1381 = vmatpush1.xpose.msra.mxu0 0.0
        %1382 = vmatprep.subr.mxu0 0.0
        %1383 = vmatpush1.xpose.msra.mxu0 0.0
        %1384 = vmatprep.subr.mxu0 0.0
        %1385 = vmatpush1.xpose.msra.mxu0 0.0
        %1386 = vmatprep.subr.mxu0 0.0
        %1387 = vmatpush1.xpose.msra.mxu0 0.0
        %1388 = vmatprep.subr.mxu0 0.0
        %1389 = vmatpush1.xpose.msra.mxu0 0.0
        %1390 = vmatprep.subr.mxu0 0.0
        %1391 = vmatpush1.xpose.msra.mxu0 0.0
        %1392 = vmatprep.subr.mxu0 0.0
        %1393 = vmatpush1.xpose.msra.mxu0 0.0
        %1394 = vmatprep.subr.mxu0 0.0
        %1395 = vmatpush1.xpose.msra.mxu0 0.0
        %1396 = vmatprep.subr.mxu0 0.0
        %1397 = vmatpush1.xpose.msra.mxu0 0.0
        %1398 = vmatprep.subr.mxu0 0.0
        %1399 = vmatpush1.xpose.msra.mxu0 0.0
        %1400 = vmatprep.subr.mxu0 0.0
        %1401 = vmatpush1.xpose.msra.mxu0 0.0
        %1402 = vmatprep.subr.mxu0 0.0
        %1403 = vmatpush1.xpose.msra.mxu0 0.0
        %1404 = vmatprep.subr.mxu0 0.0
        %1405 = vmatpush1.xpose.msra.mxu0 0.0
        %1406 = vmatprep.subr.mxu0 0.0
        %1407 = vmatpush1.xpose.msra.mxu0 0.0
        %1408 = vmatprep.subr.mxu0 0.0
        %1409 = vmatpush1.xpose.msra.mxu0 0.0
        %1410 = vmatprep.subr.mxu0 0.0
        %1411 = vmatpush1.xpose.msra.mxu0 0.0
        %1412 = vmatprep.subr.mxu0 0.0
        %1413 = vmatpush1.xpose.msra.mxu0 0.0
        %1414 = vmatprep.subr.mxu0 0.0
        %1415 = vmatpush1.xpose.msra.mxu0 0.0
        %1416 = vmatprep.mubr.f32.mxu0 0.0
        %1417 = vmatmul.mubr.f32.gmra.mrb[0].mxu0 %v1344
        %v1418 = vpop.f32.mrb[0].mxu0
        %v1419 = vadd.f32 0.0, %v1418
        %v1420 = vpop.f32.mrb[0].mxu0
        %1421 = vdwg.mxu0
        %v1422 = vmul.f32 %v1419, 0.17677669
        %vm1423 = vcmask 97280
        %v1424 = vsel %vm1423, %v1422, -inf
        %1425 = vmax.xlane.f32.xlu0 %v1424
        %v1426 = vpop.xlane.xlu0 %1425
        %v1427 = vsub.f32 %v1422, %v1426
        %v1428 = vmul.f32 %v1427, 1.442695
        %v1429 = vpow.pop %v1428
        %v1430 = vsel %vm1423, %v1429, 0.0
        %1431 = vadd.xlane.f32.xlu0 %v1430
        %v1432 = vpop.xlane.xlu0 %1431
        %v1433 = vrcp.pop %v1432
        %v1434 = vmul.f32 %v1429, %v1433
        %v1436 = vsel %vm1423, %v1434, 0
        %vm1438 = vcmask 1043456
        %v1440 = vsel %vm1438, %v1340, 0
        %1442 = vmatprep.subr.mxu0 0.0
        %1443 = vmatpush1.msra.mxu0 %v1335
        %1444 = vmatprep.subr.mxu0 0.0
        %1445 = vmatpush1.msra.mxu0 %v1440
        %1446 = vmatprep.subr.mxu0 0.0
        %1447 = vmatpush1.msra.mxu0 0.0
        %1448 = vmatprep.subr.mxu0 0.0
        %1449 = vmatpush1.msra.mxu0 0.0
        %1450 = vmatprep.subr.mxu0 0.0
        %1451 = vmatpush1.msra.mxu0 0.0
        %1452 = vmatprep.subr.mxu0 0.0
        %1453 = vmatpush1.msra.mxu0 0.0
        %1454 = vmatprep.subr.mxu0 0.0
        %1455 = vmatpush1.msra.mxu0 0.0
        %1456 = vmatprep.subr.mxu0 0.0
        %1457 = vmatpush1.msra.mxu0 0.0
        %1458 = vmatprep.subr.mxu0 0.0
        %1459 = vmatpush1.msra.mxu0 0.0
        %1460 = vmatprep.subr.mxu0 0.0
        %1461 = vmatpush1.msra.mxu0 0.0
        %1462 = vmatprep.subr.mxu0 0.0
        %1463 = vmatpush1.msra.mxu0 0.0
        %1464 = vmatprep.subr.mxu0 0.0
        %1465 = vmatpush1.msra.mxu0 0.0
        %1466 = vmatprep.subr.mxu0 0.0
        %1467 = vmatpush1.msra.mxu0 0.0
        %1468 = vmatprep.subr.mxu0 0.0
        %1469 = vmatpush1.msra.mxu0 0.0
        %1470 = vmatprep.subr.mxu0 0.0
        %1471 = vmatpush1.msra.mxu0 0.0
        %1472 = vmatprep.subr.mxu0 0.0
        %1473 = vmatpush1.msra.mxu0 0.0
        %1474 = vmatprep.subr.mxu0 0.0
        %1475 = vmatpush1.msra.mxu0 0.0
        %1476 = vmatprep.subr.mxu0 0.0
        %1477 = vmatpush1.msra.mxu0 0.0
        %1478 = vmatprep.subr.mxu0 0.0
        %1479 = vmatpush1.msra.mxu0 0.0
        %1480 = vmatprep.subr.mxu0 0.0
        %1481 = vmatpush1.msra.mxu0 0.0
        %1482 = vmatprep.subr.mxu0 0.0
        %1483 = vmatpush1.msra.mxu0 0.0
        %1484 = vmatprep.subr.mxu0 0.0
        %1485 = vmatpush1.msra.mxu0 0.0
        %1486 = vmatprep.subr.mxu0 0.0
        %1487 = vmatpush1.msra.mxu0 0.0
        %1488 = vmatprep.subr.mxu0 0.0
        %1489 = vmatpush1.msra.mxu0 0.0
        %1490 = vmatprep.subr.mxu0 0.0
        %1491 = vmatpush1.msra.mxu0 0.0
        %1492 = vmatprep.subr.mxu0 0.0
        %1493 = vmatpush1.msra.mxu0 0.0
        %1494 = vmatprep.subr.mxu0 0.0
        %1495 = vmatpush1.msra.mxu0 0.0
        %1496 = vmatprep.subr.mxu0 0.0
        %1497 = vmatpush1.msra.mxu0 0.0
        %1498 = vmatprep.subr.mxu0 0.0
        %1499 = vmatpush1.msra.mxu0 0.0
        %1500 = vmatprep.subr.mxu0 0.0
        %1501 = vmatpush1.msra.mxu0 0.0
        %1502 = vmatprep.subr.mxu0 0.0
        %1503 = vmatpush1.msra.mxu0 0.0
        %1504 = vmatprep.subr.mxu0 0.0
        %1505 = vmatpush1.msra.mxu0 0.0
        %1506 = vmatprep.mubr.f32.mxu0 0.0
        %1507 = vmatmul.mubr.f32.gmra.mrb[0].mxu0 %v1436
        %v1508 = vpop.f32.mrb[0].mxu0
        %v1509 = vadd.f32 0.0, %v1508
        %v1510 = vpop.f32.mrb[0].mxu0
        %1511 = vdwg.mxu0
        %v1513 = vsel %vm574, %v1509, 0
        %1515 = vmatprep.subr.mxu0 0.0
        %1516 = vmatpush1.msra.mxu0 %v1110
        %1517 = vmatprep.subr.mxu0 0.0
        %1518 = vmatpush1.msra.mxu0 %v1111
        %1519 = vmatprep.subr.mxu0 0.0
        %1520 = vmatpush1.msra.mxu0 %v1112
        %1521 = vmatprep.subr.mxu0 0.0
        %1522 = vmatpush1.msra.mxu0 %v1113
        %1523 = vmatprep.subr.mxu0 0.0
        %1524 = vmatpush1.msra.mxu0 0.0
        %1525 = vmatprep.subr.mxu0 0.0
        %1526 = vmatpush1.msra.mxu0 0.0
        %1527 = vmatprep.subr.mxu0 0.0
        %1528 = vmatpush1.msra.mxu0 0.0
        %1529 = vmatprep.subr.mxu0 0.0
        %1530 = vmatpush1.msra.mxu0 0.0
        %1531 = vmatprep.subr.mxu0 0.0
        %1532 = vmatpush1.msra.mxu0 0.0
        %1533 = vmatprep.subr.mxu0 0.0
        %1534 = vmatpush1.msra.mxu0 0.0
        %1535 = vmatprep.subr.mxu0 0.0
        %1536 = vmatpush1.msra.mxu0 0.0
        %1537 = vmatprep.subr.mxu0 0.0
        %1538 = vmatpush1.msra.mxu0 0.0
        %1539 = vmatprep.subr.mxu0 0.0
        %1540 = vmatpush1.msra.mxu0 0.0
        %1541 = vmatprep.subr.mxu0 0.0
        %1542 = vmatpush1.msra.mxu0 0.0
        %1543 = vmatprep.subr.mxu0 0.0
        %1544 = vmatpush1.msra.mxu0 0.0
        %1545 = vmatprep.subr.mxu0 0.0
        %1546 = vmatpush1.msra.mxu0 0.0
        %1547 = vmatprep.subr.mxu0 0.0
        %1548 = vmatpush1.msra.mxu0 0.0
        %1549 = vmatprep.subr.mxu0 0.0
        %1550 = vmatpush1.msra.mxu0 0.0
        %1551 = vmatprep.subr.mxu0 0.0
        %1552 = vmatpush1.msra.mxu0 0.0
        %1553 = vmatprep.subr.mxu0 0.0
        %1554 = vmatpush1.msra.mxu0 0.0
        %1555 = vmatprep.subr.mxu0 0.0
        %1556 = vmatpush1.msra.mxu0 0.0
        %1557 = vmatprep.subr.mxu0 0.0
        %1558 = vmatpush1.msra.mxu0 0.0
        %1559 = vmatprep.subr.mxu0 0.0
        %1560 = vmatpush1.msra.mxu0 0.0
        %1561 = vmatprep.subr.mxu0 0.0
        %1562 = vmatpush1.msra.mxu0 0.0
        %1563 = vmatprep.subr.mxu0 0.0
        %1564 = vmatpush1.msra.mxu0 0.0
        %1565 = vmatprep.subr.mxu0 0.0
        %1566 = vmatpush1.msra.mxu0 0.0
        %1567 = vmatprep.subr.mxu0 0.0
        %1568 = vmatpush1.msra.mxu0 0.0
        %1569 = vmatprep.subr.mxu0 0.0
        %1570 = vmatpush1.msra.mxu0 0.0
        %1571 = vmatprep.subr.mxu0 0.0
        %1572 = vmatpush1.msra.mxu0 0.0
        %1573 = vmatprep.subr.mxu0 0.0
        %1574 = vmatpush1.msra.mxu0 0.0
        %1575 = vmatprep.subr.mxu0 0.0
        %1576 = vmatpush1.msra.mxu0 0.0
        %1577 = vmatprep.subr.mxu0 0.0
        %1578 = vmatpush1.msra.mxu0 0.0
        %1579 = vmatprep.mubr.f32.mxu0 0.0
        %1580 = vmatmul.mubr.f32.gmra.mrb[0].mxu0 %v1513
        %v1581 = vpop.f32.mrb[0].mxu0
        %v1582 = vadd.f32 0.0, %v1581
        %v1583 = vpop.f32.mrb[0].mxu0
        %1584 = vdwg.mxu0
        %v1585 = vadd.f32 %v1097, %v1582
        %1586 = vmatprep.subr.mxu0 0.0
        %1587 = vmatpush1.msra.mxu0 %v1585
        %1588 = vmatprep.subr.mxu0 0.0
        %1589 = vmatpush1.msra.mxu0 0.0
        %1590 = vmatprep.subr.mxu0 0.0
        %1591 = vmatpush1.msra.mxu0 0.0
        %1592 = vmatprep.subr.mxu0 0.0
        %1593 = vmatpush1.msra.mxu0 0.0
        %1594 = vmatprep.subr.mxu0 0.0
        %1595 = vmatpush1.msra.mxu0 0.0
        %1596 = vmatprep.subr.mxu0 0.0
        %1597 = vmatpush1.msra.mxu0 0.0
        %1598 = vmatprep.subr.mxu0 0.0
        %1599 = vmatpush1.msra.mxu0 0.0
        %1600 = vmatprep.subr.mxu0 0.0
        %1601 = vmatpush1.msra.mxu0 0.0
        %1602 = vmatprep.subr.mxu0 0.0
        %1603 = vmatpush1.msra.mxu0 0.0
        %1604 = vmatprep.subr.mxu0 0.0
        %1605 = vmatpush1.msra.mxu0 0.0
        %1606 = vmatprep.subr.mxu0 0.0
        %1607 = vmatpush1.msra.mxu0 0.0
        %1608 = vmatprep.subr.mxu0 0.0
        %1609 = vmatpush1.msra.mxu0 0.0
        %1610 = vmatprep.subr.mxu0 0.0
        %1611 = vmatpush1.msra.mxu0 0.0
        %1612 = vmatprep.subr.mxu0 0.0
        %1613 = vmatpush1.msra.mxu0 0.0
        %1614 = vmatprep.subr.mxu0 0.0
        %1615 = vmatpush1.msra.mxu0 0.0
        %1616 = vmatprep.subr.mxu0 0.0
        %1617 = vmatpush1.msra.mxu0 0.0
        %1618 = vmatprep.subr.mxu0 0.0
        %1619 = vmatpush1.msra.mxu0 0.0
        %1620 = vmatprep.subr.mxu0 0.0
        %1621 = vmatpush1.msra.mxu0 0.0
        %1622 = vmatprep.subr.mxu0 0.0
        %1623 = vmatpush1.msra.mxu0 0.0
        %1624 = vmatprep.subr.mxu0 0.0
        %1625 = vmatpush1.msra.mxu0 0.0
        %1626 = vmatprep.subr.mxu0 0.0
        %1627 = vmatpush1.msra.mxu0 0.0
        %1628 = vmatprep.subr.mxu0 0.0
        %1629 = vmatpush1.msra.mxu0 0.0
        %1630 = vmatprep.subr.mxu0 0.0
        %1631 = vmatpush1.msra.mxu0 0.0
        %1632 = vmatprep.subr.mxu0 0.0
        %1633 = vmatpush1.msra.mxu0 0.0
        %1634 = vmatprep.subr.mxu0 0.0
        %1635 = vmatpush1.msra.mxu0 0.0
        %1636 = vmatprep.subr.mxu0 0.0
        %1637 = vmatpush1.msra.mxu0 0.0
        %1638 = vmatprep.subr.mxu0 0.0
        %1639 = vmatpush1.msra.mxu0 0.0
        %1640 = vmatprep.subr.mxu0 0.0
        %1641 = vmatpush1.msra.mxu0 0.0
        %1642 = vmatprep.subr.mxu0 0.0
        %1643 = vmatpush1.msra.mxu0 0.0
        %1644 = vmatprep.subr.mxu0 0.0
        %1645 = vmatpush1.msra.mxu0 0.0
        %1646 = vmatprep.subr.mxu0 0.0
        %1647 = vmatpush1.msra.mxu0 0.0
        %1648 = vmatprep.subr.mxu0 0.0
        %1649 = vmatpush1.msra.mxu0 0.0
        %1650 = vmatprep.mubr.f32.mxu0 0.0
        %1651 = vmatmul.mubr.f32.gmra.mrb[0].mxu0 %v1025
        %v1652 = vpop.f32.mrb[0].mxu0
        %v1653 = vadd.f32 0.0, %v1652
        %v1654 = vpop.f32.mrb[0].mxu0
        %1655 = vdwg.mxu0
        %v1656 = vsub.f32 %v1585, %v1653
        %v1657 = vld [vmem:[%s11] sm:$0xff]
        %v1658 = vld [vmem:[%s11 + $0x8] sm:$0xff]
        %v1659 = vld [vmem:[%s11 + $0x10] sm:$0xff]
        %v1660 = vld [vmem:[%s11 + $0x18] sm:$0xff]
        %v1662 = vsel %vm574, %v1656, 0
        %1664 = vmatprep.subr.mxu0 0.0
        %1665 = vmatpush1.msra.mxu0 %v1657
        %1666 = vmatprep.subr.mxu0 0.0
        %1667 = vmatpush1.msra.mxu0 %v1658
        %1668 = vmatprep.subr.mxu0 0.0
        %1669 = vmatpush1.msra.mxu0 %v1659
        %1670 = vmatprep.subr.mxu0 0.0
        %1671 = vmatpush1.msra.mxu0 %v1660
        %1672 = vmatprep.subr.mxu0 0.0
        %1673 = vmatpush1.msra.mxu0 0.0
        %1674 = vmatprep.subr.mxu0 0.0
        %1675 = vmatpush1.msra.mxu0 0.0
        %1676 = vmatprep.subr.mxu0 0.0
        %1677 = vmatpush1.msra.mxu0 0.0
        %1678 = vmatprep.subr.mxu0 0.0
        %1679 = vmatpush1.msra.mxu0 0.0
        %1680 = vmatprep.subr.mxu0 0.0
        %1681 = vmatpush1.msra.mxu0 0.0
        %1682 = vmatprep.subr.mxu0 0.0
        %1683 = vmatpush1.msra.mxu0 0.0
        %1684 = vmatprep.subr.mxu0 0.0
        %1685 = vmatpush1.msra.mxu0 0.0
        %1686 = vmatprep.subr.mxu0 0.0
        %1687 = vmatpush1.msra.mxu0 0.0
        %1688 = vmatprep.subr.mxu0 0.0
        %1689 = vmatpush1.msra.mxu0 0.0
        %1690 = vmatprep.subr.mxu0 0.0
        %1691 = vmatpush1.msra.mxu0 0.0
        %1692 = vmatprep.subr.mxu0 0.0
        %1693 = vmatpush1.msra.mxu0 0.0
        %1694 = vmatprep.subr.mxu0 0.0
        %1695 = vmatpush1.msra.mxu0 0.0
        %1696 = vmatprep.subr.mxu0 0.0
        %1697 = vmatpush1.msra.mxu0 0.0
        %1698 = vmatprep.subr.mxu0 0.0
        %1699 = vmatpush1.msra.mxu0 0.0
        %1700 = vmatprep.subr.mxu0 0.0
        %1701 = vmatpush1.msra.mxu0 0.0
        %1702 = vmatprep.subr.mxu0 0.0
        %1703 = vmatpush1.msra.mxu0 0.0
        %1704 = vmatprep.subr.mxu0 0.0
        %1705 = vmatpush1.msra.mxu0 0.0
        %1706 = vmatprep.subr.mxu0 0.0
        %1707 = vmatpush1.msra.mxu0 0.0
        %1708 = vmatprep.subr.mxu0 0.0
        %1709 = vmatpush1.msra.mxu0 0.0
        %1710 = vmatprep.subr.mxu0 0.0
        %1711 = vmatpush1.msra.mxu0 0.0
        %1712 = vmatprep.subr.mxu0 0.0
        %1713 = vmatpush1.msra.mxu0 0.0
        %1714 = vmatprep.subr.mxu0 0.0
        %1715 = vmatpush1.msra.mxu0 0.0
        %1716 = vmatprep.subr.mxu0 0.0
        %1717 = vmatpush1.msra.mxu0 0.0
        %1718 = vmatprep.subr.mxu0 0.0
        %1719 = vmatpush1.msra.mxu0 0.0
        %1720 = vmatprep.subr.mxu0 0.0
        %1721 = vmatpush1.msra.mxu0 0.0
        %1722 = vmatprep.subr.mxu0 0.0
        %1723 = vmatpush1.msra.mxu0 0.0
        %1724 = vmatprep.subr.mxu0 0.0
        %1725 = vmatpush1.msra.mxu0 0.0
        %1726 = vmatprep.subr.mxu0 0.0
        %1727 = vmatpush1.msra.mxu0 0.0
        %1728 = vmatprep.mubr.f32.mxu0 0.0
        %1729 = vmatmul.mubr.f32.gmra.mrb[0].mxu0 %v1662
        %v1730 = vpop.f32.mrb[0].mxu0
        %v1731 = vadd.f32 0.0, %v1730
        %v1732 = vpop.f32.mrb[0].mxu0
        %1733 = vdwg.mxu0
        %v1734 = vmax.f32 %v1731, 0.0
        %v1735 = vld [vmem:[%s12] sm:$0xff]
        %v1736 = vld [vmem:[%s12 + $0x8] sm:$0xff]
        %v1737 = vld [vmem:[%s12 + $0x10] sm:$0xff]
        %v1738 = vld [vmem:[%s12 + $0x18] sm:$0xff]
        %v1739 = vld [vmem:[%s12 + $0x20] sm:$0xff]
        %v1740 = vld [vmem:[%s12 + $0x28] sm:$0xff]
        %v1741 = vld [vmem:[%s12 + $0x30] sm:$0xff]
        %v1742 = vld [vmem:[%s12 + $0x38] sm:$0xff]
        %v1743 = vld [vmem:[%s12 + $0x40] sm:$0xff]
        %v1744 = vld [vmem:[%s12 + $0x48] sm:$0xff]
        %v1745 = vld [vmem:[%s12 + $0x50] sm:$0xff]
        %v1746 = vld [vmem:[%s12 + $0x58] sm:$0xff]
        %v1747 = vld [vmem:[%s12 + $0x60] sm:$0xff]
        %v1748 = vld [vmem:[%s12 + $0x68] sm:$0xff]
        %v1749 = vld [vmem:[%s12 + $0x70] sm:$0xff]
        %v1750 = vld [vmem:[%s12 + $0x78] sm:$0xff]
        %1751 = vmatprep.subr.mxu0 0.0
        %1752 = vmatpush1.msra.mxu0 %v1735
        %1753 = vmatprep.subr.mxu0 0.0
        %1754 = vmatpush1.msra.mxu0 %v1736
        %1755 = vmatprep.subr.mxu0 0.0
        %1756 = vmatpush1.msra.mxu0 %v1737
        %1757 = vmatprep.subr.mxu0 0.0
        %1758 = vmatpush1.msra.mxu0 %v1738
        %1759 = vmatprep.subr.mxu0 0.0
        %1760 = vmatpush1.msra.mxu0 %v1739
        %1761 = vmatprep.subr.mxu0 0.0
        %1762 = vmatpush1.msra.mxu0 %v1740
        %1763 = vmatprep.subr.mxu0 0.0
        %1764 = vmatpush1.msra.mxu0 %v1741
        %1765 = vmatprep.subr.mxu0 0.0
        %1766 = vmatpush1.msra.mxu0 %v1742
        %1767 = vmatprep.subr.mxu0 0.0
        %1768 = vmatpush1.msra.mxu0 %v1743
        %1769 = vmatprep.subr.mxu0 0.0
        %1770 = vmatpush1.msra.mxu0 %v1744
        %1771 = vmatprep.subr.mxu0 0.0
        %1772 = vmatpush1.msra.mxu0 %v1745
        %1773 = vmatprep.subr.mxu0 0.0
        %1774 = vmatpush1.msra.mxu0 %v1746
        %1775 = vmatprep.subr.mxu0 0.0
        %1776 = vmatpush1.msra.mxu0 %v1747
        %1777 = vmatprep.subr.mxu0 0.0
        %1778 = vmatpush1.msra.mxu0 %v1748
        %1779 = vmatprep.subr.mxu0 0.0
        %1780 = vmatpush1.msra.mxu0 %v1749
        %1781 = vmatprep.subr.mxu0 0.0
        %1782 = vmatpush1.msra.mxu0 %v1750
        %1783 = vmatprep.subr.mxu0 0.0
        %1784 = vmatpush1.msra.mxu0 0.0
        %1785 = vmatprep.subr.mxu0 0.0
        %1786 = vmatpush1.msra.mxu0 0.0
        %1787 = vmatprep.subr.mxu0 0.0
        %1788 = vmatpush1.msra.mxu0 0.0
        %1789 = vmatprep.subr.mxu0 0.0
        %1790 = vmatpush1.msra.mxu0 0.0
        %1791 = vmatprep.subr.mxu0 0.0
        %1792 = vmatpush1.msra.mxu0 0.0
        %1793 = vmatprep.subr.mxu0 0.0
        %1794 = vmatpush1.msra.mxu0 0.0
        %1795 = vmatprep.subr.mxu0 0.0
        %1796 = vmatpush1.msra.mxu0 0.0
        %1797 = vmatprep.subr.mxu0 0.0
        %1798 = vmatpush1.msra.mxu0 0.0
        %1799 = vmatprep.subr.mxu0 0.0
        %1800 = vmatpush1.msra.mxu0 0.0
        %1801 = vmatprep.subr.mxu0 0.0
        %1802 = vmatpush1.msra.mxu0 0.0
        %1803 = vmatprep.subr.mxu0 0.0
        %1804 = vmatpush1.msra.mxu0 0.0
        %1805 = vmatprep.subr.mxu0 0.0
        %1806 = vmatpush1.msra.mxu0 0.0
        %1807 = vmatprep.subr.mxu0 0.0
        %1808 = vmatpush1.msra.mxu0 0.0
        %1809 = vmatprep.subr.mxu0 0.0
        %1810 = vmatpush1.msra.mxu0 0.0
        %1811 = vmatprep.subr.mxu0 0.0
        %1812 = vmatpush1.msra.mxu0 0.0
        %1813 = vmatprep.subr.mxu0 0.0
        %1814 = vmatpush1.msra.mxu0 0.0
        %1815 = vmatprep.mubr.f32.mxu0 0.0
        %1816 = vmatmul.mubr.f32.gmra.mrb[0].mxu0 %v1734
        %v1817 = vpop.f32.mrb[0].mxu0
        %v1818 = vadd.f32 0.0, %v1817
        %v1819 = vpop.f32.mrb[0].mxu0
        %1820 = vdwg.mxu0
        %v1821 = vadd.f32 %v1656, %v1818
        %1822 = vmatprep.subr.mxu0 0.0
        %1823 = vmatpush1.msra.mxu0 %v1821
        %1824 = vmatprep.subr.mxu0 0.0
        %1825 = vmatpush1.msra.mxu0 0.0
        %1826 = vmatprep.subr.mxu0 0.0
        %1827 = vmatpush1.msra.mxu0 0.0
        %1828 = vmatprep.subr.mxu0 0.0
        %1829 = vmatpush1.msra.mxu0 0.0
        %1830 = vmatprep.subr.mxu0 0.0
        %1831 = vmatpush1.msra.mxu0 0.0
        %1832 = vmatprep.subr.mxu0 0.0
        %1833 = vmatpush1.msra.mxu0 0.0
        %1834 = vmatprep.subr.mxu0 0.0
        %1835 = vmatpush1.msra.mxu0 0.0
        %1836 = vmatprep.subr.mxu0 0.0
        %1837 = vmatpush1.msra.mxu0 0.0
        %1838 = vmatprep.subr.mxu0 0.0
        %1839 = vmatpush1.msra.mxu0 0.0
        %1840 = vmatprep.subr.mxu0 0.0
        %1841 = vmatpush1.msra.mxu0 0.0
        %1842 = vmatprep.subr.mxu0 0.0
        %1843 = vmatpush1.msra.mxu0 0.0
        %1844 = vmatprep.subr.mxu0 0.0
        %1845 = vmatpush1.msra.mxu0 0.0
        %1846 = vmatprep.subr.mxu0 0.0
        %1847 = vmatpush1.msra.mxu0 0.0
        %1848 = vmatprep.subr.mxu0 0.0
        %1849 = vmatpush1.msra.mxu0 0.0
        %1850 = vmatprep.subr.mxu0 0.0
        %1851 = vmatpush1.msra.mxu0 0.0
        %1852 = vmatprep.subr.mxu0 0.0
        %1853 = vmatpush1.msra.mxu0 0.0
        %1854 = vmatprep.subr.mxu0 0.0
        %1855 = vmatpush1.msra.mxu0 0.0
        %1856 = vmatprep.subr.mxu0 0.0
        %1857 = vmatpush1.msra.mxu0 0.0
        %1858 = vmatprep.subr.mxu0 0.0
        %1859 = vmatpush1.msra.mxu0 0.0
        %1860 = vmatprep.subr.mxu0 0.0
        %1861 = vmatpush1.msra.mxu0 0.0
        %1862 = vmatprep.subr.mxu0 0.0
        %1863 = vmatpush1.msra.mxu0 0.0
        %1864 = vmatprep.subr.mxu0 0.0
        %1865 = vmatpush1.msra.mxu0 0.0
        %1866 = vmatprep.subr.mxu0 0.0
        %1867 = vmatpush1.msra.mxu0 0.0
        %1868 = vmatprep.subr.mxu0 0.0
        %1869 = vmatpush1.msra.mxu0 0.0
        %1870 = vmatprep.subr.mxu0 0.0
        %1871 = vmatpush1.msra.mxu0 0.0
        %1872 = vmatprep.subr.mxu0 0.0
        %1873 = vmatpush1.msra.mxu0 0.0
        %1874 = vmatprep.subr.mxu0 0.0
        %1875 = vmatpush1.msra.mxu0 0.0
        %1876 = vmatprep.subr.mxu0 0.0
        %1877 = vmatpush1.msra.mxu0 0.0
        %1878 = vmatprep.subr.mxu0 0.0
        %1879 = vmatpush1.msra.mxu0 0.0
        %1880 = vmatprep.subr.mxu0 0.0
        %1881 = vmatpush1.msra.mxu0 0.0
        %1882 = vmatprep.subr.mxu0 0.0
        %1883 = vmatpush1.msra.mxu0 0.0
        %1884 = vmatprep.subr.mxu0 0.0
        %1885 = vmatpush1.msra.mxu0 0.0
        %1886 = vmatprep.mubr.f32.mxu0 0.0
        %1887 = vmatmul.mubr.f32.gmra.mrb[0].mxu0 %v1025
        %v1888 = vpop.f32.mrb[0].mxu0
        %v1889 = vadd.f32 0.0, %v1888
        %v1890 = vpop.f32.mrb[0].mxu0
        %1891 = vdwg.mxu0
        %v1892 = vsub.f32 %v1821, %v1889
        %1893 = vst.msk [vmem:[%s541] sm:$0xff] %vm574, %v1892
        %v1894 = vadd.f32 %v1094, %v1653
        %v1895 = vadd.f32 %v1894, %v1889
        %v1896 = vrot.slane %v1895, 7
        %v1897 = vrot.slane %v1895, 1
        %1899 = vrot.lane.b32.xlu0 %v1895, 32
        %v1900 = vpop.permute.xlu0 %1899
        %1903 = vrot.lane.b32.xlu0 %v1897, 64
        %v1904 = vpop.permute.xlu0 %1903
        %v1906 = vsel %vm574, %v1896, %v1900
        %vm1907 = vcmask 523264
        %v1908 = vsel %vm1907, %v1906, %v1904
        %v1909 = vld [vmem:[%s13] sm:$0xff]
        %v1910 = vld [vmem:[%s13 + $0x8] sm:$0xff]
        %v1911 = vld [vmem:[%s13 + $0x10] sm:$0xff]
        %v1912 = vld [vmem:[%s13 + $0x18] sm:$0xff]
        %v1913 = vld [vmem:[%s13 + $0x20] sm:$0xff]
        %v1914 = vld [vmem:[%s13 + $0x28] sm:$0xff]
        %v1915 = vld [vmem:[%s13 + $0x30] sm:$0xff]
        %v1916 = vld [vmem:[%s13 + $0x38] sm:$0xff]
        %v1917 = vld [vmem:[%s13 + $0x40] sm:$0xff]
        %v1918 = vld [vmem:[%s13 + $0x48] sm:$0xff]
        %v1919 = vld [vmem:[%s13 + $0x50] sm:$0xff]
        %v1920 = vld [vmem:[%s13 + $0x58] sm:$0xff]
        %vm1921 = vcmask 785408
        %v1923 = vsel %vm1921, %v1908, 0
        %1925 = vmatprep.subr.mxu0 0.0
        %1926 = vmatpush1.msra.mxu0 %v1909
        %1927 = vmatprep.subr.mxu0 0.0
        %1928 = vmatpush1.msra.mxu0 %v1910
        %1929 = vmatprep.subr.mxu0 0.0
        %1930 = vmatpush1.msra.mxu0 %v1911
        %1931 = vmatprep.subr.mxu0 0.0
        %1932 = vmatpush1.msra.mxu0 %v1912
        %1933 = vmatprep.subr.mxu0 0.0
        %1934 = vmatpush1.msra.mxu0 %v1913
        %1935 = vmatprep.subr.mxu0 0.0
        %1936 = vmatpush1.msra.mxu0 %v1914
        %1937 = vmatprep.subr.mxu0 0.0
        %1938 = vmatpush1.msra.mxu0 %v1915
        %1939 = vmatprep.subr.mxu0 0.0
        %1940 = vmatpush1.msra.mxu0 %v1916
        %1941 = vmatprep.subr.mxu0 0.0
        %1942 = vmatpush1.msra.mxu0 %v1917
        %1943 = vmatprep.subr.mxu0 0.0
        %1944 = vmatpush1.msra.mxu0 %v1918
        %1945 = vmatprep.subr.mxu0 0.0
        %1946 = vmatpush1.msra.mxu0 %v1919
        %1947 = vmatprep.subr.mxu0 0.0
        %1948 = vmatpush1.msra.mxu0 %v1920
        %1949 = vmatprep.subr.mxu0 0.0
        %1950 = vmatpush1.msra.mxu0 0.0
        %1951 = vmatprep.subr.mxu0 0.0
        %1952 = vmatpush1.msra.mxu0 0.0
        %1953 = vmatprep.subr.mxu0 0.0
        %1954 = vmatpush1.msra.mxu0 0.0
        %1955 = vmatprep.subr.mxu0 0.0
        %1956 = vmatpush1.msra.mxu0 0.0
        %1957 = vmatprep.subr.mxu0 0.0
        %1958 = vmatpush1.msra.mxu0 0.0
        %1959 = vmatprep.subr.mxu0 0.0
        %1960 = vmatpush1.msra.mxu0 0.0
        %1961 = vmatprep.subr.mxu0 0.0
        %1962 = vmatpush1.msra.mxu0 0.0
        %1963 = vmatprep.subr.mxu0 0.0
        %1964 = vmatpush1.msra.mxu0 0.0
        %1965 = vmatprep.subr.mxu0 0.0
        %1966 = vmatpush1.msra.mxu0 0.0
        %1967 = vmatprep.subr.mxu0 0.0
        %1968 = vmatpush1.msra.mxu0 0.0
        %1969 = vmatprep.subr.mxu0 0.0
        %1970 = vmatpush1.msra.mxu0 0.0
        %1971 = vmatprep.subr.mxu0 0.0
        %1972 = vmatpush1.msra.mxu0 0.0
        %1973 = vmatprep.subr.mxu0 0.0
        %1974 = vmatpush1.msra.mxu0 0.0
        %1975 = vmatprep.subr.mxu0 0.0
        %1976 = vmatpush1.msra.mxu0 0.0
        %1977 = vmatprep.subr.mxu0 0.0
        %1978 = vmatpush1.msra.mxu0 0.0
        %1979 = vmatprep.subr.mxu0 0.0
        %1980 = vmatpush1.msra.mxu0 0.0
        %1981 = vmatprep.subr.mxu0 0.0
        %1982 = vmatpush1.msra.mxu0 0.0
        %1983 = vmatprep.subr.mxu0 0.0
        %1984 = vmatpush1.msra.mxu0 0.0
        %1985 = vmatprep.subr.mxu0 0.0
        %1986 = vmatpush1.msra.mxu0 0.0
        %1987 = vmatprep.subr.mxu0 0.0
        %1988 = vmatpush1.msra.mxu0 0.0
        %1989 = vmatprep.mubr.f32.mxu0 0.0
        %1990 = vmatmul.mubr.f32.gmra.mrb[0].mxu0 %v1923
        %v1991 = vpop.f32.mrb[0].mxu0
        %v1992 = vadd.f32 0.0, %v1991
        %v1993 = vpop.f32.mrb[0].mxu0
        %1994 = vdwg.mxu0
        %1995 = vst.msk [vmem:[%s548] sm:$0xff] %vm865, %v1992
        %s1996 = sand.u32 %s349, 1
        %s1997 = scalar_lea.sflag [#allocation4], %s1996
        %s1998 = sand.u32 %s349, 1
        %s1999 = smul.addr %s1998, 8
        %s2000 = scalar_lea.vmem [#allocation7], %s1999
        %s2001 = sand.u32 %s375, 1
        %s2002 = scalar_lea.sflag [#allocation9], %s2001
        %s2003 = sand.u32 %s375, 1
        %s2004 = smul.addr %s2003, 8
        %s2005 = scalar_lea.vmem [#allocation8], %s2004
        // Predicated region
        $region85: #{tpu_custom_call.1} parent=75 // pred_check
          %p2006 = pneg %p359
        $region86: #{tpu_custom_call.1} parent=75 // pred_check_branch
          %2008 = sbr.rel (%p2006) target = $region88
        $region87: #{tpu_custom_call.1} parent=75 // pred_region
          %s2010 = ssub.s32 128, 128
          %2011 = vsyncadd %s1997, %s2010
          %s2012 = smul.addr %s37, 128
          %s2013 = scalar_lea.hbm %s14, %s2012
          %s2015 = sshll.u32 %s2000, 4
          %s2016 = int_to_ptr.vmem [resolvable:$true] %s2015
          %2018 = dma.vmem_to_hbm [thread:$0]  %s2016, 128, %s2013, %s1997
        $region88: #{tpu_custom_call.1} parent=75 // pred_fallthru
          _
        // Predicated region
        $region89: #{tpu_custom_call.1} parent=75 // pred_check
          %p2019 = pneg %p385
        $region90: #{tpu_custom_call.1} parent=75 // pred_check_branch
          %2021 = sbr.rel (%p2019) target = $region92
        $region91: #{tpu_custom_call.1} parent=75 // pred_region
          %s2023 = ssub.s32 128, 128
          %2024 = vsyncadd %s2002, %s2023
          %s2025 = smul.addr %s37, 128
          %s2026 = scalar_lea.hbm %s15, %s2025
          %s2028 = sshll.u32 %s2005, 4
          %s2029 = int_to_ptr.vmem [resolvable:$true] %s2028
          %2031 = dma.vmem_to_hbm [thread:$0]  %s2029, 128, %s2026, %s2002
        $region92: #{tpu_custom_call.1} parent=75 // pred_fallthru
          _
      $region76: #{tpu_custom_call.1} parent=5 // pred_fallthru
        _
      %p2032 = scmp.le.s32.totalorder 2, %s32
      // Predicated region
      $region93: #{tpu_custom_call.1} parent=5 // pred_check
        %p2033 = pneg %p2032
      $region94: #{tpu_custom_call.1} parent=5 // pred_check_branch
        %2035 = sbr.rel (%p2033) target = $region96
      $region95: #{tpu_custom_call.1} parent=5 // pred_region
        %s2036 = ssub.s32 %s32, 2
        // Predicated region
        $region97: #{tpu_custom_call.1} parent=95 // pred_check
          %p2037 = pneg %p365
        $region98: #{tpu_custom_call.1} parent=95 // pred_check_branch
          %2039 = sbr.rel (%p2037) target = $region100
        $region99: #{tpu_custom_call.1} parent=95 // pred_region
          %s2040 = sand.u32 %s350, 1
          %s2041 = scalar_lea.sflag [#allocation4], %s2040
          %s2042 = sand.u32 %s350, 1
          %s2043 = smul.addr %s2042, 8
          %s2044 = scalar_lea.vmem [#allocation7], %s2043
          %2045 = dma.done %s2041, 128
        $region100: #{tpu_custom_call.1} parent=95 // pred_fallthru
          _
        // Predicated region
        $region101: #{tpu_custom_call.1} parent=95 // pred_check
          %p2046 = pneg %p391
        $region102: #{tpu_custom_call.1} parent=95 // pred_check_branch
          %2048 = sbr.rel (%p2046) target = $region104
        $region103: #{tpu_custom_call.1} parent=95 // pred_region
          %s2049 = sand.u32 %s376, 1
          %s2050 = scalar_lea.sflag [#allocation9], %s2049
          %s2051 = sand.u32 %s376, 1
          %s2052 = smul.addr %s2051, 8
          %s2053 = scalar_lea.vmem [#allocation8], %s2052
          %2054 = dma.done %s2050, 128
        $region104: #{tpu_custom_call.1} parent=95 // pred_fallthru
          _
      $region96: #{tpu_custom_call.1} parent=5 // pred_fallthru
        _
    $region6: #{tpu_custom_call.1} parent=1 // loop_footer
      %s36 = sadd.s32 1, %s32
    $region7: #{tpu_custom_call.1} parent=1 // loop_footer_branch
      %31 = sbr.rel target = $region3
    $region8: #{tpu_custom_call.1} parent=1 // loop_exit
      _
    %2055 = vsyncpa [#allocation3], 1
    %s2056 = scalar_lea.sflag [#allocation3], 1
    %2057 = vsyncpa %s2056, 1
    %2058 = vsyncpa [#allocation6], 1
    %2059 = vsyncpa [#allocation4], 1
    %s2060 = scalar_lea.sflag [#allocation4], 1
    %2061 = vsyncpa %s2060, 1
    %2062 = vsyncpa [#allocation9], 1
    %s2063 = scalar_lea.sflag [#allocation9], 1
    %2064 = vsyncpa %s2063, 1

</llo_original>
